<compile_context>
chip_gen: v6e
topology: v6e:2x2x1
jax: 0.10.0
libtpu: 0.0.40
codegen_flags: <defaults>
</compile_context>

<pallas_src>
import jax
import jax.numpy as jnp
from jax.experimental import pallas as pl
from jax.experimental.pallas import tpu as pltpu


def _downsample_conv_kernel(x_ref, w_ref, b_ref, o_ref):
    """Fused im2col + conv-GEMM for one image of the batch.

    x_ref: (1, Hout+1, 2, Wout+1, 2*Cin)  zero-padded NHWC image, H and W
           pre-split into (pair, parity) so each conv tap is a contiguous slice
    w_ref: (3, 3, Cin, Cout)              conv weights (kh, kw, ci, co)
    b_ref: (1, Cout)                      bias
    o_ref: (1, Cout, Hout*Wout)           NCHW-flattened output block
    """
    _, hp1, _, wp1, cin2 = x_ref.shape
    hout, wout, cin = hp1 - 1, wp1 - 1, cin2 // 2
    cout = o_ref.shape[1]
    m = hout * wout

    w_all = w_ref[...]                                   # (3, 3, Cin, Cout)

    acc = jnp.zeros((m, cout), dtype=jnp.float32)
    for kh in range(3):                                  # statically unrolled: 9 taps
        for kw in range(3):
            # padded-input pixel (2r+kh, 2c+kw) == pair (r+kh//2, c+kw//2),
            # parity (kh%2, kw%2)  -> contiguous slice, no strided access.
            xs = x_ref[0,
                       pl.ds(kh // 2, hout),
                       pl.ds(kh % 2, 1),
                       pl.ds(kw // 2, wout),
                       pl.ds((kw % 2) * cin, cin)]       # (hout, 1, wout, cin)
            xs = xs.reshape(m, cin)
            acc = acc + jnp.dot(xs, w_all[kh, kw],
                                preferred_element_type=jnp.float32)

    acc = acc + b_ref[...].astype(jnp.float32)           # (m, cout) + (1, cout)
    # Single transpose so the HBM store is lane-dense over Hout*Wout and the
    # output is already NCHW (no host-side output transpose needed).
    o_ref[0] = acc.T.astype(o_ref.dtype)                 # (cout, m)


def _round_up(a, m):
    return (a + m - 1) // m * m


@jax.jit
def downsample_forward(x_nchw, weight, bias):
    """Strided 3x3 conv, stride=2, padding=1 (matches nn.Conv2d semantics).

    x_nchw: (B, Cin, H, W) float32
    weight: (Cout, Cin, 3, 3) float32   (PyTorch OIHW convention)
    bias:   (Cout,) float32
    returns (B, Cout, H//2, W//2) float32
    """
    B, Cin, H, W = x_nchw.shape
    Cout = weight.shape[0]
    Hout = (H - 1) // 2 + 1
    Wout = (W - 1) // 2 + 1

    # NCHW -> NHWC + zero pad (conv's pad=1 on top/left, fill bottom/right so
    # the padded extents are exactly 2*Hout+2 / 2*Wout+2).  Transpose+pad is a
    # single fused XLA pass over the input; the reshape below is metadata-only.
    x = jnp.transpose(x_nchw, (0, 2, 3, 1))
    x = jnp.pad(x, ((0, 0),
                    (1, 2 * Hout + 1 - H),
                    (1, 2 * Wout + 1 - W),
                    (0, 0)))
    x = x.reshape(B, Hout + 1, 2, Wout + 1, 2 * Cin)

    # (Cout, Cin, kh, kw) -> (kh, kw, Cin, Cout)
    w = jnp.transpose(weight, (2, 3, 1, 0))
    b = bias.reshape(1, Cout)

    # Rough VMEM budget for the double-buffered blocks ((8,128)-padded layout).
    itemsize = x.dtype.itemsize
    in_blk = (Hout + 1) * 2 * _round_up(Wout + 1, 8) * _round_up(2 * Cin, 128) * itemsize
    out_blk = _round_up(Cout, 8) * _round_up(Hout * Wout, 128) * itemsize
    w_blk = 9 * _round_up(Cin, 8) * _round_up(Cout, 128) * itemsize
    vmem = int(min(max(2 * (in_blk + out_blk + w_blk) + (8 << 20), 32 << 20), 64 << 20))

    out = pl.pallas_call(
        _downsample_conv_kernel,
        out_shape=jax.ShapeDtypeStruct((B, Cout, Hout * Wout), x_nchw.dtype),
        grid_spec=pltpu.PrefetchScalarGridSpec(
            num_scalar_prefetch=0,
            grid=(B,),
            in_specs=[
                pl.BlockSpec((1, Hout + 1, 2, Wout + 1, 2 * Cin),
                             lambda bi: (bi, 0, 0, 0, 0)),
                pl.BlockSpec((3, 3, Cin, Cout), lambda bi: (0, 0, 0, 0)),
                pl.BlockSpec((1, Cout), lambda bi: (0, 0)),
            ],
            out_specs=pl.BlockSpec((1, Cout, Hout * Wout),
                                   lambda bi: (bi, 0, 0)),
        ),
        compiler_params=pltpu.CompilerParams(
            dimension_semantics=("parallel",),
            vmem_limit_bytes=vmem,
        ),
    )(x, w, b)

    # (B, Cout, Hout*Wout) -> (B, Cout, Hout, Wout): contiguous, metadata-only.
    return out.reshape(B, Cout, Hout, Wout)


if __name__ == "__main__":
    key = jax.random.PRNGKey(0)
    kx, kw, kb = jax.random.split(key, 3)

    B, Cin, H, W = 2, 4, 16, 16
    Cout = 8

    x = jax.random.normal(kx, (B, Cin, H, W), dtype=jnp.float32)
    # deterministic "kaiming-uniform-like" init, same shapes as nn.Conv2d(Cin, Cout, 3)
    fan_in = Cin * 3 * 3
    bound = 1.0 / (fan_in ** 0.5)
    weight = jax.random.uniform(kw, (Cout, Cin, 3, 3), jnp.float32, -bound, bound)
    bias = jax.random.uniform(kb, (Cout,), jnp.float32, -bound, bound)

    out = jax.block_until_ready(downsample_forward(x, weight, bias))

    # sanity check against XLA's conv (same semantics as the PyTorch module)
    ref = jax.lax.conv_general_dilated(
        x, weight, window_strides=(2, 2), padding=((1, 1), (1, 1)),
        dimension_numbers=("NCHW", "OIHW", "NCHW"),
    ) + bias.reshape(1, Cout, 1, 1)

    assert out.shape == (B, Cout, H // 2, W // 2), out.shape
    assert jnp.allclose(out, ref, atol=1e-4, rtol=1e-4), "mismatch vs reference conv"

    print("KERNEL_OK")
</pallas_src>

<mosaic_0001>
module attributes {stable_mosaic.version = 11 : i64} {
  func.func @_downsample_conv_kernel(%arg0: i32, %arg1: memref<1x9x2x9x8xf32, #tpu.memory_space<vmem>>, %arg2: memref<3x3x4x8xf32, #tpu.memory_space<vmem>>, %arg3: memref<1x8xf32, #tpu.memory_space<vmem>>, %arg4: memref<1x8x64xf32, #tpu.memory_space<vmem>>) attributes {dimension_semantics = [#tpu.dimension_semantics<parallel>], iteration_bounds = array<i64: 2>, scalar_prefetch = 0 : i64, scratch_operands = 0 : i64, tpu.core_type = #tpu.core_type<tc>, window_params = [{transform_indices = @transform_0, window_bounds = array<i64: 1, 9, 2, 9, 8>}, {pipeline_mode = #tpu.pipeline_mode<synchronous>, transform_indices = @transform_1, window_bounds = array<i64: 3, 3, 4, 8>}, {pipeline_mode = #tpu.pipeline_mode<synchronous>, transform_indices = @transform_2, window_bounds = array<i64: 1, 8>}, {transform_indices = @transform_3, window_bounds = array<i64: 1, 8, 64>}]} {
    %c0 = arith.constant 0 : index
    %c0_0 = arith.constant 0 : index
    %c0_1 = arith.constant 0 : index
    %c0_2 = arith.constant 0 : index
    %0 = vector.load %arg2[%c0, %c0_0, %c0_1, %c0_2] : memref<3x3x4x8xf32, #tpu.memory_space<vmem>>, vector<3x3x4x8xf32>
    %cst = arith.constant 0.000000e+00 : f32
    %1 = vector.broadcast %cst : f32 to vector<64x8xf32>
    %c0_3 = arith.constant 0 : index
    %c0_4 = arith.constant 0 : index
    %c0_5 = arith.constant 0 : index
    %c0_6 = arith.constant 0 : index
    %c0_7 = arith.constant 0 : index
    %2 = vector.load %arg1[%c0_3, %c0_4, %c0_5, %c0_6, %c0_7] : memref<1x9x2x9x8xf32, #tpu.memory_space<vmem>>, vector<1x8x1x8x4xf32>
    %3 = vector.shape_cast %2 : vector<1x8x1x8x4xf32> to vector<8x1x8x4xf32>
    %4 = vector.shape_cast %3 : vector<8x1x8x4xf32> to vector<64x4xf32>
    %5 = vector.extract_strided_slice %0 {offsets = [0, 0, 0, 0], sizes = [1, 1, 4, 8], strides = [1, 1, 1, 1]} : vector<3x3x4x8xf32> to vector<1x1x4x8xf32>
    %6 = vector.shape_cast %5 : vector<1x1x4x8xf32> to vector<4x8xf32>
    %cst_8 = arith.constant dense<0.000000e+00> : vector<64x8xf32>
    %7 = tpu.matmul %4, %6, %cst_8 {dimension_numbers = #tpu.dot_dimension_numbers<[1], [0], [0], [1], [0, 0, 1, 1], [], []>} : vector<64x4xf32>, vector<4x8xf32>, vector<64x8xf32> -> vector<64x8xf32>
    %8 = arith.addf %1, %7 : vector<64x8xf32>
    %c0_9 = arith.constant 0 : index
    %c0_10 = arith.constant 0 : index
    %c0_11 = arith.constant 0 : index
    %c0_12 = arith.constant 0 : index
    %c4 = arith.constant 4 : index
    %9 = vector.load %arg1[%c0_9, %c0_10, %c0_11, %c0_12, %c4] : memref<1x9x2x9x8xf32, #tpu.memory_space<vmem>>, vector<1x8x1x8x4xf32>
    %10 = vector.shape_cast %9 : vector<1x8x1x8x4xf32> to vector<8x1x8x4xf32>
    %11 = vector.shape_cast %10 : vector<8x1x8x4xf32> to vector<64x4xf32>
    %12 = vector.extract_strided_slice %0 {offsets = [0, 1, 0, 0], sizes = [1, 1, 4, 8], strides = [1, 1, 1, 1]} : vector<3x3x4x8xf32> to vector<1x1x4x8xf32>
    %13 = vector.shape_cast %12 : vector<1x1x4x8xf32> to vector<4x8xf32>
    %cst_13 = arith.constant dense<0.000000e+00> : vector<64x8xf32>
    %14 = tpu.matmul %11, %13, %cst_13 {dimension_numbers = #tpu.dot_dimension_numbers<[1], [0], [0], [1], [0, 0, 1, 1], [], []>} : vector<64x4xf32>, vector<4x8xf32>, vector<64x8xf32> -> vector<64x8xf32>
    %15 = arith.addf %8, %14 : vector<64x8xf32>
    %c0_14 = arith.constant 0 : index
    %c0_15 = arith.constant 0 : index
    %c0_16 = arith.constant 0 : index
    %c1 = arith.constant 1 : index
    %c0_17 = arith.constant 0 : index
    %16 = vector.load %arg1[%c0_14, %c0_15, %c0_16, %c1, %c0_17] : memref<1x9x2x9x8xf32, #tpu.memory_space<vmem>>, vector<1x8x1x8x4xf32>
    %17 = vector.shape_cast %16 : vector<1x8x1x8x4xf32> to vector<8x1x8x4xf32>
    %18 = vector.shape_cast %17 : vector<8x1x8x4xf32> to vector<64x4xf32>
    %19 = vector.extract_strided_slice %0 {offsets = [0, 2, 0, 0], sizes = [1, 1, 4, 8], strides = [1, 1, 1, 1]} : vector<3x3x4x8xf32> to vector<1x1x4x8xf32>
    %20 = vector.shape_cast %19 : vector<1x1x4x8xf32> to vector<4x8xf32>
    %cst_18 = arith.constant dense<0.000000e+00> : vector<64x8xf32>
    %21 = tpu.matmul %18, %20, %cst_18 {dimension_numbers = #tpu.dot_dimension_numbers<[1], [0], [0], [1], [0, 0, 1, 1], [], []>} : vector<64x4xf32>, vector<4x8xf32>, vector<64x8xf32> -> vector<64x8xf32>
    %22 = arith.addf %15, %21 : vector<64x8xf32>
    %c0_19 = arith.constant 0 : index
    %c0_20 = arith.constant 0 : index
    %c1_21 = arith.constant 1 : index
    %c0_22 = arith.constant 0 : index
    %c0_23 = arith.constant 0 : index
    %23 = vector.load %arg1[%c0_19, %c0_20, %c1_21, %c0_22, %c0_23] : memref<1x9x2x9x8xf32, #tpu.memory_space<vmem>>, vector<1x8x1x8x4xf32>
    %24 = vector.shape_cast %23 : vector<1x8x1x8x4xf32> to vector<8x1x8x4xf32>
    %25 = vector.shape_cast %24 : vector<8x1x8x4xf32> to vector<64x4xf32>
    %26 = vector.extract_strided_slice %0 {offsets = [1, 0, 0, 0], sizes = [1, 1, 4, 8], strides = [1, 1, 1, 1]} : vector<3x3x4x8xf32> to vector<1x1x4x8xf32>
    %27 = vector.shape_cast %26 : vector<1x1x4x8xf32> to vector<4x8xf32>
    %cst_24 = arith.constant dense<0.000000e+00> : vector<64x8xf32>
    %28 = tpu.matmul %25, %27, %cst_24 {dimension_numbers = #tpu.dot_dimension_numbers<[1], [0], [0], [1], [0, 0, 1, 1], [], []>} : vector<64x4xf32>, vector<4x8xf32>, vector<64x8xf32> -> vector<64x8xf32>
    %29 = arith.addf %22, %28 : vector<64x8xf32>
    %c0_25 = arith.constant 0 : index
    %c0_26 = arith.constant 0 : index
    %c1_27 = arith.constant 1 : index
    %c0_28 = arith.constant 0 : index
    %c4_29 = arith.constant 4 : index
    %30 = vector.load %arg1[%c0_25, %c0_26, %c1_27, %c0_28, %c4_29] : memref<1x9x2x9x8xf32, #tpu.memory_space<vmem>>, vector<1x8x1x8x4xf32>
    %31 = vector.shape_cast %30 : vector<1x8x1x8x4xf32> to vector<8x1x8x4xf32>
    %32 = vector.shape_cast %31 : vector<8x1x8x4xf32> to vector<64x4xf32>
    %33 = vector.extract_strided_slice %0 {offsets = [1, 1, 0, 0], sizes = [1, 1, 4, 8], strides = [1, 1, 1, 1]} : vector<3x3x4x8xf32> to vector<1x1x4x8xf32>
    %34 = vector.shape_cast %33 : vector<1x1x4x8xf32> to vector<4x8xf32>
    %cst_30 = arith.constant dense<0.000000e+00> : vector<64x8xf32>
    %35 = tpu.matmul %32, %34, %cst_30 {dimension_numbers = #tpu.dot_dimension_numbers<[1], [0], [0], [1], [0, 0, 1, 1], [], []>} : vector<64x4xf32>, vector<4x8xf32>, vector<64x8xf32> -> vector<64x8xf32>
    %36 = arith.addf %29, %35 : vector<64x8xf32>
    %c0_31 = arith.constant 0 : index
    %c0_32 = arith.constant 0 : index
    %c1_33 = arith.constant 1 : index
    %c1_34 = arith.constant 1 : index
    %c0_35 = arith.constant 0 : index
    %37 = vector.load %arg1[%c0_31, %c0_32, %c1_33, %c1_34, %c0_35] : memref<1x9x2x9x8xf32, #tpu.memory_space<vmem>>, vector<1x8x1x8x4xf32>
    %38 = vector.shape_cast %37 : vector<1x8x1x8x4xf32> to vector<8x1x8x4xf32>
    %39 = vector.shape_cast %38 : vector<8x1x8x4xf32> to vector<64x4xf32>
    %40 = vector.extract_strided_slice %0 {offsets = [1, 2, 0, 0], sizes = [1, 1, 4, 8], strides = [1, 1, 1, 1]} : vector<3x3x4x8xf32> to vector<1x1x4x8xf32>
    %41 = vector.shape_cast %40 : vector<1x1x4x8xf32> to vector<4x8xf32>
    %cst_36 = arith.constant dense<0.000000e+00> : vector<64x8xf32>
    %42 = tpu.matmul %39, %41, %cst_36 {dimension_numbers = #tpu.dot_dimension_numbers<[1], [0], [0], [1], [0, 0, 1, 1], [], []>} : vector<64x4xf32>, vector<4x8xf32>, vector<64x8xf32> -> vector<64x8xf32>
    %43 = arith.addf %36, %42 : vector<64x8xf32>
    %c0_37 = arith.constant 0 : index
    %c1_38 = arith.constant 1 : index
    %c0_39 = arith.constant 0 : index
    %c0_40 = arith.constant 0 : index
    %c0_41 = arith.constant 0 : index
    %44 = vector.load %arg1[%c0_37, %c1_38, %c0_39, %c0_40, %c0_41] : memref<1x9x2x9x8xf32, #tpu.memory_space<vmem>>, vector<1x8x1x8x4xf32>
    %45 = vector.shape_cast %44 : vector<1x8x1x8x4xf32> to vector<8x1x8x4xf32>
    %46 = vector.shape_cast %45 : vector<8x1x8x4xf32> to vector<64x4xf32>
    %47 = vector.extract_strided_slice %0 {offsets = [2, 0, 0, 0], sizes = [1, 1, 4, 8], strides = [1, 1, 1, 1]} : vector<3x3x4x8xf32> to vector<1x1x4x8xf32>
    %48 = vector.shape_cast %47 : vector<1x1x4x8xf32> to vector<4x8xf32>
    %cst_42 = arith.constant dense<0.000000e+00> : vector<64x8xf32>
    %49 = tpu.matmul %46, %48, %cst_42 {dimension_numbers = #tpu.dot_dimension_numbers<[1], [0], [0], [1], [0, 0, 1, 1], [], []>} : vector<64x4xf32>, vector<4x8xf32>, vector<64x8xf32> -> vector<64x8xf32>
    %50 = arith.addf %43, %49 : vector<64x8xf32>
    %c0_43 = arith.constant 0 : index
    %c1_44 = arith.constant 1 : index
    %c0_45 = arith.constant 0 : index
    %c0_46 = arith.constant 0 : index
    %c4_47 = arith.constant 4 : index
    %51 = vector.load %arg1[%c0_43, %c1_44, %c0_45, %c0_46, %c4_47] : memref<1x9x2x9x8xf32, #tpu.memory_space<vmem>>, vector<1x8x1x8x4xf32>
    %52 = vector.shape_cast %51 : vector<1x8x1x8x4xf32> to vector<8x1x8x4xf32>
    %53 = vector.shape_cast %52 : vector<8x1x8x4xf32> to vector<64x4xf32>
    %54 = vector.extract_strided_slice %0 {offsets = [2, 1, 0, 0], sizes = [1, 1, 4, 8], strides = [1, 1, 1, 1]} : vector<3x3x4x8xf32> to vector<1x1x4x8xf32>
    %55 = vector.shape_cast %54 : vector<1x1x4x8xf32> to vector<4x8xf32>
    %cst_48 = arith.constant dense<0.000000e+00> : vector<64x8xf32>
    %56 = tpu.matmul %53, %55, %cst_48 {dimension_numbers = #tpu.dot_dimension_numbers<[1], [0], [0], [1], [0, 0, 1, 1], [], []>} : vector<64x4xf32>, vector<4x8xf32>, vector<64x8xf32> -> vector<64x8xf32>
    %57 = arith.addf %50, %56 : vector<64x8xf32>
    %c0_49 = arith.constant 0 : index
    %c1_50 = arith.constant 1 : index
    %c0_51 = arith.constant 0 : index
    %c1_52 = arith.constant 1 : index
    %c0_53 = arith.constant 0 : index
    %58 = vector.load %arg1[%c0_49, %c1_50, %c0_51, %c1_52, %c0_53] : memref<1x9x2x9x8xf32, #tpu.memory_space<vmem>>, vector<1x8x1x8x4xf32>
    %59 = vector.shape_cast %58 : vector<1x8x1x8x4xf32> to vector<8x1x8x4xf32>
    %60 = vector.shape_cast %59 : vector<8x1x8x4xf32> to vector<64x4xf32>
    %61 = vector.extract_strided_slice %0 {offsets = [2, 2, 0, 0], sizes = [1, 1, 4, 8], strides = [1, 1, 1, 1]} : vector<3x3x4x8xf32> to vector<1x1x4x8xf32>
    %62 = vector.shape_cast %61 : vector<1x1x4x8xf32> to vector<4x8xf32>
    %cst_54 = arith.constant dense<0.000000e+00> : vector<64x8xf32>
    %63 = tpu.matmul %60, %62, %cst_54 {dimension_numbers = #tpu.dot_dimension_numbers<[1], [0], [0], [1], [0, 0, 1, 1], [], []>} : vector<64x4xf32>, vector<4x8xf32>, vector<64x8xf32> -> vector<64x8xf32>
    %64 = arith.addf %57, %63 : vector<64x8xf32>
    %c0_55 = arith.constant 0 : index
    %c0_56 = arith.constant 0 : index
    %65 = vector.load %arg3[%c0_55, %c0_56] : memref<1x8xf32, #tpu.memory_space<vmem>>, vector<1x8xf32>
    %66 = vector.broadcast %65 : vector<1x8xf32> to vector<64x8xf32>
    %67 = arith.addf %64, %66 : vector<64x8xf32>
    %68 = tpu.transpose %67, [1, 0] : vector<64x8xf32> -> vector<8x64xf32>
    %c0_57 = arith.constant 0 : index
    %c0_58 = arith.constant 0 : index
    %c0_59 = arith.constant 0 : index
    %69 = vector.load %arg4[%c0_57, %c0_58, %c0_59] : memref<1x8x64xf32, #tpu.memory_space<vmem>>, vector<1x8x64xf32>
    %70 = vector.shape_cast %69 : vector<1x8x64xf32> to vector<8x64xf32>
    %71 = vector.shape_cast %68 : vector<8x64xf32> to vector<1x8x64xf32>
    tpu.vector_store %arg4[%c0_57, %c0_58, %c0_59], %71 {strides = array<i32>} : memref<1x8x64xf32, #tpu.memory_space<vmem>>, vector<1x8x64xf32>,
    return
  }
  func.func @transform_0(%arg0: i32) -> (i32, i32, i32, i32, i32) {
    %c0_i32 = arith.constant 0 : i32
    %c0_i32_0 = arith.constant 0 : i32
    %c0_i32_1 = arith.constant 0 : i32
    %c0_i32_2 = arith.constant 0 : i32
    %c0_i32_3 = arith.constant 0 : i32
    return %arg0, %c0_i32, %c0_i32_0, %c0_i32_1, %c0_i32_2 : i32, i32, i32, i32, i32
  }
  func.func @transform_1(%arg0: i32) -> (i32, i32, i32, i32) {
    %c0_i32 = arith.constant 0 : i32
    %c0_i32_0 = arith.constant 0 : i32
    %c0_i32_1 = arith.constant 0 : i32
    %c0_i32_2 = arith.constant 0 : i32
    %c0_i32_3 = arith.constant 0 : i32
    return %c0_i32, %c0_i32_0, %c0_i32_1, %c0_i32_2 : i32, i32, i32, i32
  }
  func.func @transform_2(%arg0: i32) -> (i32, i32) {
    %c0_i32 = arith.constant 0 : i32
    %c0_i32_0 = arith.constant 0 : i32
    %c0_i32_1 = arith.constant 0 : i32
    return %c0_i32, %c0_i32_0 : i32, i32
  }
  func.func @transform_3(%arg0: i32) -> (i32, i32, i32) {
    %c0_i32 = arith.constant 0 : i32
    %c0_i32_0 = arith.constant 0 : i32
    %c0_i32_1 = arith.constant 0 : i32
    return %arg0, %c0_i32, %c0_i32_0 : i32, i32, i32
  }
}

</mosaic_0001>

<llo_original>
// kernel: downsample_forward.1
$region0: #{downsample_forward.1}
  #allocation0 [shape = 'u32[]', space=smem, size = 0x4, offset = 0x4, fixed_abs, tag = 'smem constant byte address 0x4 - core index']
  #allocation1 [shape = 'u32[144,128]{1,0:T(1,128)}', space=vmem, size = 0x12000, scoped, tag = 'internal scratch']
  %s0 = inlined_call_operand.vmem [shape: f32[2,9,2,9,8], index: 0, kind: input, shape index: {}]
  %s1 = inlined_call_operand.vmem [shape: f32[3,3,4,8], index: 1, kind: input, shape index: {}]
  %s2 = inlined_call_operand.vmem [shape: f32[1,8], index: 2, kind: input, shape index: {}]
  %s3 = inlined_call_operand.vmem [shape: f32[2,8,64], index: 3, kind: output, shape index: {}]
  %s4 = sld [smem:[#allocation0]]
  $region45: #{downsample_forward.1} parent=0
    _
  %s6 = ssub.s32 1, %s4
  %s7 = scalar_select 0, %s6, %s4
  loop: start=0, step=1, limit=4
  $region2: #{downsample_forward.1} parent=0 // loop_pre_header
    _
  $region3: #{downsample_forward.1} parent=0 // loop_header
    %s9 = sphi 0, %s13
    %p10 = scmp.ge.s32.totalorder %s9, 4
    %s19 = sphi 0, %s21
    %s22 = sphi 0, %s19
    %s23 = sphi 0, %s22
    %s39 = sphi 0, %s23
    %s43 = sphi 0, %s43
    %s45 = sphi 0, %s43
    %s46 = sphi 0, %s45
    %s60 = sphi 0, %s46
    %s64 = sphi 0, %s64
    %s66 = sphi 0, %s64
    %s67 = sphi 0, %s66
    %s81 = sphi 0, %s67
    %s87 = sphi 0, %s89
    %s90 = sphi 0, %s87
    %s91 = sphi 0, %s90
    %s107 = sphi 0, %s91
  $region4: #{downsample_forward.1} parent=0 // loop_header_branch
    %12 = sbr.rel (%p10) target = $region8
  $region5: #{downsample_forward.1} parent=0 // loop_body
    %s14 = ssub.s32 %s9, 1
    %s15 = ssub.s32 %s9, 2
    %s16 = sadd.s32 %s9, 1
    %s17 = ssub.s32 %s9, %s16
    %p18 = scmp.eq.s32.totalorder %s17, 0
    %s20 = sadd.s32 %s19, 1
    %s21 = scalar_select %p18, %s19, %s20
    %p24 = pneg %p18
    %p25 = scmp.eq.s32.totalorder %s9, 1
    %p26 = por %p24, %p25
    %p27 = scmp.ne.s32.totalorder %s19, %s22
    %p28 = scmp.eq.s32.totalorder %s9, 0
    %p29 = por %p27, %p28
    %p30 = scmp.ne.s32.totalorder %s19, %s22
    %p31 = scmp.eq.s32.totalorder %s14, 1
    %p32 = por %p30, %p31
    %p33 = scmp.ne.s32.totalorder %s22, %s23
    %p34 = scmp.eq.s32.totalorder %s14, 0
    %p35 = por %p33, %p34
    %p36 = scmp.ne.s32.totalorder %s22, %s23
    %p37 = scmp.eq.s32.totalorder %s15, 1
    %p38 = por %p36, %p37
    %p40 = scmp.ne.s32.totalorder %s23, %s39
    %p41 = scmp.eq.s32.totalorder %s15, 0
    %p42 = por %p40, %p41
    %s44 = sadd.s32 %s43, 1
    %p47 = scmp.eq.s32.totalorder %s9, 1
    %p48 = scmp.ne.s32.totalorder %s43, %s45
    %p49 = scmp.eq.s32.totalorder %s9, 0
    %p50 = por %p48, %p49
    %p51 = scmp.ne.s32.totalorder %s43, %s45
    %p52 = scmp.eq.s32.totalorder %s14, 1
    %p53 = por %p51, %p52
    %p54 = scmp.ne.s32.totalorder %s45, %s46
    %p55 = scmp.eq.s32.totalorder %s14, 0
    %p56 = por %p54, %p55
    %p57 = scmp.ne.s32.totalorder %s45, %s46
    %p58 = scmp.eq.s32.totalorder %s15, 1
    %p59 = por %p57, %p58
    %p61 = scmp.ne.s32.totalorder %s46, %s60
    %p62 = scmp.eq.s32.totalorder %s15, 0
    %p63 = por %p61, %p62
    %s65 = sadd.s32 %s64, 1
    %p68 = scmp.eq.s32.totalorder %s9, 1
    %p69 = scmp.ne.s32.totalorder %s64, %s66
    %p70 = scmp.eq.s32.totalorder %s9, 0
    %p71 = por %p69, %p70
    %p72 = scmp.ne.s32.totalorder %s64, %s66
    %p73 = scmp.eq.s32.totalorder %s14, 1
    %p74 = por %p72, %p73
    %p75 = scmp.ne.s32.totalorder %s66, %s67
    %p76 = scmp.eq.s32.totalorder %s14, 0
    %p77 = por %p75, %p76
    %p78 = scmp.ne.s32.totalorder %s66, %s67
    %p79 = scmp.eq.s32.totalorder %s15, 1
    %p80 = por %p78, %p79
    %p82 = scmp.ne.s32.totalorder %s67, %s81
    %p83 = scmp.eq.s32.totalorder %s15, 0
    %p84 = por %p82, %p83
    %s85 = ssub.s32 %s9, %s16
    %p86 = scmp.eq.s32.totalorder %s85, 0
    %s88 = sadd.s32 %s87, 1
    %s89 = scalar_select %p86, %s87, %s88
    %p92 = pneg %p86
    %p93 = scmp.eq.s32.totalorder %s9, 1
    %p94 = por %p92, %p93
    %p95 = scmp.ne.s32.totalorder %s87, %s90
    %p96 = scmp.eq.s32.totalorder %s9, 0
    %p97 = por %p95, %p96
    %p98 = scmp.ne.s32.totalorder %s87, %s90
    %p99 = scmp.eq.s32.totalorder %s14, 1
    %p100 = por %p98, %p99
    %p101 = scmp.ne.s32.totalorder %s90, %s91
    %p102 = scmp.eq.s32.totalorder %s14, 0
    %p103 = por %p101, %p102
    %p104 = scmp.ne.s32.totalorder %s90, %s91
    %p105 = scmp.eq.s32.totalorder %s15, 1
    %p106 = por %p104, %p105
    %p108 = scmp.ne.s32.totalorder %s91, %s107
    %p109 = scmp.eq.s32.totalorder %s15, 0
    %p110 = por %p108, %p109
    %p111 = scmp.le.s32.totalorder 1, %s9
    %p112 = scmp.lt.s32.totalorder %s9, 3
    %p113 = pnand %p111, %p112
    %p114 = pneg %p113
    // Predicated region
    $region9: #{downsample_forward.1} parent=5 // pred_check
      _
    $region10: #{downsample_forward.1} parent=5 // pred_check_branch
      %116 = sbr.rel (%p113) target = $region12
    $region11: #{downsample_forward.1} parent=5 // pred_region
      %s117 = ssub.s32 %s9, 1
      // Predicated region
      $region13: #{downsample_forward.1} parent=11 // pred_check
        %p118 = pneg %p56
      $region14: #{downsample_forward.1} parent=11 // pred_check_branch
        %120 = sbr.rel (%p118) target = $region16
      $region15: #{downsample_forward.1} parent=11 // pred_region
        _
      $region16: #{downsample_forward.1} parent=11 // pred_fallthru
        _
      // Predicated region
      $region17: #{downsample_forward.1} parent=11 // pred_check
        %p121 = pneg %p77
      $region18: #{downsample_forward.1} parent=11 // pred_check_branch
        %123 = sbr.rel (%p121) target = $region20
      $region19: #{downsample_forward.1} parent=11 // pred_region
        _
      $region20: #{downsample_forward.1} parent=11 // pred_fallthru
        _
    $region12: #{downsample_forward.1} parent=5 // pred_fallthru
      _
    %p124 = scmp.lt.s32.totalorder %s9, 2
    // Predicated region
    $region21: #{downsample_forward.1} parent=5 // pred_check
      %p125 = pneg %p124
    $region22: #{downsample_forward.1} parent=5 // pred_check_branch
      %127 = sbr.rel (%p125) target = $region24
    $region23: #{downsample_forward.1} parent=5 // pred_region
      // Predicated region
      $region25: #{downsample_forward.1} parent=23 // pred_check
        %p128 = pneg %p29
      $region26: #{downsample_forward.1} parent=23 // pred_check_branch
        %130 = sbr.rel (%p128) target = $region28
      $region27: #{downsample_forward.1} parent=23 // pred_region
        %p131 = scmp.lt.s32.totalorder %s9, 1
        %s132 = scalar_select %p131, %s9, 1
        %s133 = smul.addr %s132, 36
        %s134 = smul.addr %s133, 8
        %s135 = scalar_lea.vmem %s0, %s134
      $region28: #{downsample_forward.1} parent=23 // pred_fallthru
        _
    $region24: #{downsample_forward.1} parent=5 // pred_fallthru
      _
    %p136 = scmp.le.s32.totalorder 1, %s9
    %p137 = scmp.lt.s32.totalorder %s9, 3
    %p138 = pnand %p136, %p137
    %p139 = pneg %p138
    // Predicated region
    $region29: #{downsample_forward.1} parent=5 // pred_check
      _
    $region30: #{downsample_forward.1} parent=5 // pred_check_branch
      %141 = sbr.rel (%p138) target = $region32
    $region31: #{downsample_forward.1} parent=5 // pred_region
      %s142 = ssub.s32 %s9, 1
      %p143 = scmp.lt.s32.totalorder %s14, 1
      %s144 = scalar_select %p143, %s14, 1
      %s145 = smul.addr %s144, 36
      %s146 = smul.addr %s145, 8
      %s147 = scalar_lea.vmem %s0, %s146
      %p148 = pneg %p35
      %p149 = pneg %p32
      %p150 = pneg %p56
      %p151 = pneg %p53
      %p152 = pneg %p77
      %p153 = pneg %p74
      %p154 = pneg %p103
      %p155 = pneg %p100
      %p156 = scmp.lt.s32.totalorder %s14, 1
      %s157 = scalar_select %p156, %s14, 1
      %s158 = smul.addr %s157, 8
      %s159 = scalar_lea.vmem %s3, %s158
      %p160 = scmp.lt.s32.totalorder %s14, 1
      %s161 = scalar_select %p160, %s14, 1
      %s162 = smul.addr %s161, 36
      %s163 = smul.addr %s162, 8
      %s164 = scalar_lea.vmem %s0, %s163
      %p165 = scmp.lt.s32.totalorder %s14, 1
      %s166 = scalar_select %p165, %s14, 1
      %s167 = smul.addr %s166, 8
      %s168 = scalar_lea.vmem %s3, %s167
      %v169 = vld [vmem:[%s1] sm:$0xf]
      %v170 = vld [vmem:[%s1 + $0x4] sm:$0xf]
      %v171 = vld [vmem:[%s1 + $0x8] sm:$0xf]
      %v172 = vld [vmem:[%s1 + $0xc] sm:$0xf]
      %v173 = vld [vmem:[%s1 + $0x10] sm:$0xf]
      %v174 = vld [vmem:[%s1 + $0x14] sm:$0xf]
      %v175 = vld [vmem:[%s1 + $0x18] sm:$0xf]
      %v176 = vld [vmem:[%s1 + $0x1c] sm:$0xf]
      %v177 = vld [vmem:[%s1 + $0x20] sm:$0xf]
      %v178 = vld [vmem:[%s164] sm:$0xff]
      %v179 = vld [vmem:[%s164 + $0x20] sm:$0xff]
      %v180 = vld [vmem:[%s164 + $0x40] sm:$0xff]
      %v181 = vld [vmem:[%s164 + $0x60] sm:$0xff]
      %v182 = vld [vmem:[%s164 + $0x80] sm:$0xff]
      %v183 = vld [vmem:[%s164 + $0xa0] sm:$0xff]
      %v184 = vld [vmem:[%s164 + $0xc0] sm:$0xff]
      %v185 = vld [vmem:[%s164 + $0xe0] sm:$0xff]
      %194 = vrot.lane.b32.xlu0 %v178, 124
      %v195 = vpop.permute.xlu0 %194
      %196 = vrot.lane.b32.xlu0 %v179, 124
      %v197 = vpop.permute.xlu0 %196
      %198 = vrot.lane.b32.xlu0 %v180, 124
      %v199 = vpop.permute.xlu0 %198
      %200 = vrot.lane.b32.xlu0 %v181, 124
      %v201 = vpop.permute.xlu0 %200
      %202 = vrot.lane.b32.xlu0 %v182, 124
      %v203 = vpop.permute.xlu0 %202
      %204 = vrot.lane.b32.xlu0 %v183, 124
      %v205 = vpop.permute.xlu0 %204
      %206 = vrot.lane.b32.xlu0 %v184, 124
      %v207 = vpop.permute.xlu0 %206
      %208 = vrot.lane.b32.xlu0 %v185, 124
      %v209 = vpop.permute.xlu0 %208
      %vm210 = vcmask 31744
      %v211 = vsel %vm210, %v195, 0
      %v213 = vsel %vm210, %v197, 0
      %v215 = vsel %vm210, %v199, 0
      %v217 = vsel %vm210, %v201, 0
      %v219 = vsel %vm210, %v203, 0
      %v221 = vsel %vm210, %v205, 0
      %v223 = vsel %vm210, %v207, 0
      %v225 = vsel %vm210, %v209, 0
      %vm227 = vcmask 1043456
      %v229 = vsel %vm227, %v170, 0
      %231 = vmatprep.subr.mxu0 0.0
      %232 = vmatpush1.msra.mxu0 0.0
      %233 = vmatprep.subr.mxu0 0.0
      %234 = vmatpush1.msra.mxu0 0.0
      %235 = vmatprep.subr.mxu0 0.0
      %236 = vmatpush1.msra.mxu0 0.0
      %237 = vmatprep.subr.mxu0 0.0
      %238 = vmatpush1.msra.mxu0 0.0
      %239 = vmatprep.subr.mxu0 0.0
      %240 = vmatpush1.msra.mxu0 0.0
      %241 = vmatprep.subr.mxu0 0.0
      %242 = vmatpush1.msra.mxu0 0.0
      %243 = vmatprep.subr.mxu0 0.0
      %244 = vmatpush1.msra.mxu0 0.0
      %245 = vmatprep.subr.mxu0 0.0
      %246 = vmatpush1.msra.mxu0 0.0
      %247 = vmatprep.subr.mxu0 0.0
      %248 = vmatpush1.msra.mxu0 0.0
      %249 = vmatprep.subr.mxu0 0.0
      %250 = vmatpush1.msra.mxu0 0.0
      %251 = vmatprep.subr.mxu0 0.0
      %252 = vmatpush1.msra.mxu0 0.0
      %253 = vmatprep.subr.mxu0 0.0
      %254 = vmatpush1.msra.mxu0 0.0
      %255 = vmatprep.subr.mxu0 0.0
      %256 = vmatpush1.msra.mxu0 0.0
      %257 = vmatprep.subr.mxu0 0.0
      %258 = vmatpush1.msra.mxu0 0.0
      %259 = vmatprep.subr.mxu0 0.0
      %260 = vmatpush1.msra.mxu0 0.0
      %261 = vmatprep.subr.mxu0 0.0
      %262 = vmatpush1.msra.mxu0 %v229
      %263 = vmatprep.subr.mxu0 0.0
      %264 = vmatpush2.msra.mxu0 0.0
      %265 = vmatprep.subr.mxu0 0.0
      %266 = vmatpush2.msra.mxu0 0.0
      %267 = vmatprep.subr.mxu0 0.0
      %268 = vmatpush2.msra.mxu0 0.0
      %269 = vmatprep.subr.mxu0 0.0
      %270 = vmatpush2.msra.mxu0 0.0
      %271 = vmatprep.subr.mxu0 0.0
      %272 = vmatpush2.msra.mxu0 0.0
      %273 = vmatprep.subr.mxu0 0.0
      %274 = vmatpush2.msra.mxu0 0.0
      %275 = vmatprep.subr.mxu0 0.0
      %276 = vmatpush2.msra.mxu0 0.0
      %277 = vmatprep.subr.mxu0 0.0
      %278 = vmatpush2.msra.mxu0 0.0
      %279 = vmatprep.subr.mxu0 0.0
      %280 = vmatpush2.msra.mxu0 0.0
      %281 = vmatprep.subr.mxu0 0.0
      %282 = vmatpush2.msra.mxu0 0.0
      %283 = vmatprep.subr.mxu0 0.0
      %284 = vmatpush2.msra.mxu0 0.0
      %285 = vmatprep.subr.mxu0 0.0
      %286 = vmatpush2.msra.mxu0 0.0
      %287 = vmatprep.subr.mxu0 0.0
      %288 = vmatpush2.msra.mxu0 0.0
      %289 = vmatprep.subr.mxu0 0.0
      %290 = vmatpush2.msra.mxu0 0.0
      %291 = vmatprep.subr.mxu0 0.0
      %292 = vmatpush2.msra.mxu0 0.0
      %293 = vmatprep.subr.mxu0 0.0
      %294 = vmatpush2.msra.mxu0 0.0
      %295 = vmatprep.mubr.f32.mxu0 0.0
      %296 = vmatmul.mubr.f32.gmra.mxu0 %v211
      %v297 = vpop.f32.mrf.mxu0
      %v298 = vadd.f32 0.0, %v297
      %v299 = vpop.f32.mrf.mxu0
      %300 = vmatprep.mubr.f32.mxu0 0.0
      %301 = vmatmul.mubr.f32.gmra.mxu0 %v213
      %v302 = vpop.f32.mrf.mxu0
      %v303 = vadd.f32 0.0, %v302
      %v304 = vpop.f32.mrf.mxu0
      %305 = vmatprep.mubr.f32.mxu0 0.0
      %306 = vmatmul.mubr.f32.gmra.mxu0 %v215
      %v307 = vpop.f32.mrf.mxu0
      %v308 = vadd.f32 0.0, %v307
      %v309 = vpop.f32.mrf.mxu0
      %310 = vmatprep.mubr.f32.mxu0 0.0
      %311 = vmatmul.mubr.f32.gmra.mxu0 %v217
      %v312 = vpop.f32.mrf.mxu0
      %v313 = vadd.f32 0.0, %v312
      %v314 = vpop.f32.mrf.mxu0
      %315 = vmatprep.mubr.f32.mxu0 0.0
      %316 = vmatmul.mubr.f32.gmra.mxu0 %v219
      %v317 = vpop.f32.mrf.mxu0
      %v318 = vadd.f32 0.0, %v317
      %v319 = vpop.f32.mrf.mxu0
      %320 = vmatprep.mubr.f32.mxu0 0.0
      %321 = vmatmul.mubr.f32.gmra.mxu0 %v221
      %v322 = vpop.f32.mrf.mxu0
      %v323 = vadd.f32 0.0, %v322
      %v324 = vpop.f32.mrf.mxu0
      %325 = vmatprep.mubr.f32.mxu0 0.0
      %326 = vmatmul.mubr.f32.gmra.mxu0 %v223
      %v327 = vpop.f32.mrf.mxu0
      %v328 = vadd.f32 0.0, %v327
      %v329 = vpop.f32.mrf.mxu0
      %330 = vmatprep.mubr.f32.mxu0 0.0
      %331 = vmatmul.mubr.f32.gmra.mxu0 %v225
      %v332 = vpop.f32.mrf.mxu0
      %v333 = vadd.f32 0.0, %v332
      %v334 = vpop.f32.mrf.mxu0
      %335 = vdwg.mxu0
      %v336 = vsel %vm210, %v178, 0
      %v338 = vsel %vm210, %v179, 0
      %v340 = vsel %vm210, %v180, 0
      %v342 = vsel %vm210, %v181, 0
      %v344 = vsel %vm210, %v182, 0
      %v346 = vsel %vm210, %v183, 0
      %v348 = vsel %vm210, %v184, 0
      %v350 = vsel %vm210, %v185, 0
      %v353 = vsel %vm227, %v169, 0
      %355 = vmatprep.subr.mxu0 0.0
      %356 = vmatpush1.msra.mxu0 0.0
      %357 = vmatprep.subr.mxu0 0.0
      %358 = vmatpush1.msra.mxu0 0.0
      %359 = vmatprep.subr.mxu0 0.0
      %360 = vmatpush1.msra.mxu0 0.0
      %361 = vmatprep.subr.mxu0 0.0
      %362 = vmatpush1.msra.mxu0 0.0
      %363 = vmatprep.subr.mxu0 0.0
      %364 = vmatpush1.msra.mxu0 0.0
      %365 = vmatprep.subr.mxu0 0.0
      %366 = vmatpush1.msra.mxu0 0.0
      %367 = vmatprep.subr.mxu0 0.0
      %368 = vmatpush1.msra.mxu0 0.0
      %369 = vmatprep.subr.mxu0 0.0
      %370 = vmatpush1.msra.mxu0 0.0
      %371 = vmatprep.subr.mxu0 0.0
      %372 = vmatpush1.msra.mxu0 0.0
      %373 = vmatprep.subr.mxu0 0.0
      %374 = vmatpush1.msra.mxu0 0.0
      %375 = vmatprep.subr.mxu0 0.0
      %376 = vmatpush1.msra.mxu0 0.0
      %377 = vmatprep.subr.mxu0 0.0
      %378 = vmatpush1.msra.mxu0 0.0
      %379 = vmatprep.subr.mxu0 0.0
      %380 = vmatpush1.msra.mxu0 0.0
      %381 = vmatprep.subr.mxu0 0.0
      %382 = vmatpush1.msra.mxu0 0.0
      %383 = vmatprep.subr.mxu0 0.0
      %384 = vmatpush1.msra.mxu0 0.0
      %385 = vmatprep.subr.mxu0 0.0
      %386 = vmatpush1.msra.mxu0 %v353
      %387 = vmatprep.subr.mxu0 0.0
      %388 = vmatpush2.msra.mxu0 0.0
      %389 = vmatprep.subr.mxu0 0.0
      %390 = vmatpush2.msra.mxu0 0.0
      %391 = vmatprep.subr.mxu0 0.0
      %392 = vmatpush2.msra.mxu0 0.0
      %393 = vmatprep.subr.mxu0 0.0
      %394 = vmatpush2.msra.mxu0 0.0
      %395 = vmatprep.subr.mxu0 0.0
      %396 = vmatpush2.msra.mxu0 0.0
      %397 = vmatprep.subr.mxu0 0.0
      %398 = vmatpush2.msra.mxu0 0.0
      %399 = vmatprep.subr.mxu0 0.0
      %400 = vmatpush2.msra.mxu0 0.0
      %401 = vmatprep.subr.mxu0 0.0
      %402 = vmatpush2.msra.mxu0 0.0
      %403 = vmatprep.subr.mxu0 0.0
      %404 = vmatpush2.msra.mxu0 0.0
      %405 = vmatprep.subr.mxu0 0.0
      %406 = vmatpush2.msra.mxu0 0.0
      %407 = vmatprep.subr.mxu0 0.0
      %408 = vmatpush2.msra.mxu0 0.0
      %409 = vmatprep.subr.mxu0 0.0
      %410 = vmatpush2.msra.mxu0 0.0
      %411 = vmatprep.subr.mxu0 0.0
      %412 = vmatpush2.msra.mxu0 0.0
      %413 = vmatprep.subr.mxu0 0.0
      %414 = vmatpush2.msra.mxu0 0.0
      %415 = vmatprep.subr.mxu0 0.0
      %416 = vmatpush2.msra.mxu0 0.0
      %417 = vmatprep.subr.mxu0 0.0
      %418 = vmatpush2.msra.mxu0 0.0
      %419 = vmatprep.mubr.f32.mxu0 0.0
      %420 = vmatmul.mubr.f32.gmra.mxu0 %v336
      %v421 = vpop.f32.mrf.mxu0
      %v422 = vadd.f32 %v298, %v421
      %v423 = vpop.f32.mrf.mxu0
      %424 = vmatprep.mubr.f32.mxu0 0.0
      %425 = vmatmul.mubr.f32.gmra.mxu0 %v338
      %v426 = vpop.f32.mrf.mxu0
      %v427 = vadd.f32 %v303, %v426
      %v428 = vpop.f32.mrf.mxu0
      %429 = vmatprep.mubr.f32.mxu0 0.0
      %430 = vmatmul.mubr.f32.gmra.mxu0 %v340
      %v431 = vpop.f32.mrf.mxu0
      %v432 = vadd.f32 %v308, %v431
      %v433 = vpop.f32.mrf.mxu0
      %434 = vmatprep.mubr.f32.mxu0 0.0
      %435 = vmatmul.mubr.f32.gmra.mxu0 %v342
      %v436 = vpop.f32.mrf.mxu0
      %v437 = vadd.f32 %v313, %v436
      %v438 = vpop.f32.mrf.mxu0
      %439 = vmatprep.mubr.f32.mxu0 0.0
      %440 = vmatmul.mubr.f32.gmra.mxu0 %v344
      %v441 = vpop.f32.mrf.mxu0
      %v442 = vadd.f32 %v318, %v441
      %v443 = vpop.f32.mrf.mxu0
      %444 = vmatprep.mubr.f32.mxu0 0.0
      %445 = vmatmul.mubr.f32.gmra.mxu0 %v346
      %v446 = vpop.f32.mrf.mxu0
      %v447 = vadd.f32 %v323, %v446
      %v448 = vpop.f32.mrf.mxu0
      %449 = vmatprep.mubr.f32.mxu0 0.0
      %450 = vmatmul.mubr.f32.gmra.mxu0 %v348
      %v451 = vpop.f32.mrf.mxu0
      %v452 = vadd.f32 %v328, %v451
      %v453 = vpop.f32.mrf.mxu0
      %454 = vmatprep.mubr.f32.mxu0 0.0
      %455 = vmatmul.mubr.f32.gmra.mxu0 %v350
      %v456 = vpop.f32.mrf.mxu0
      %v457 = vadd.f32 %v333, %v456
      %v458 = vpop.f32.mrf.mxu0
      %459 = vdwg.mxu0
      %v460 = vld [vmem:[%s164 + $0x1] sm:$0xff]
      %v461 = vld [vmem:[%s164 + $0x21] sm:$0xff]
      %v462 = vld [vmem:[%s164 + $0x41] sm:$0xff]
      %v463 = vld [vmem:[%s164 + $0x61] sm:$0xff]
      %v464 = vld [vmem:[%s164 + $0x81] sm:$0xff]
      %v465 = vld [vmem:[%s164 + $0xa1] sm:$0xff]
      %v466 = vld [vmem:[%s164 + $0xc1] sm:$0xff]
      %v467 = vld [vmem:[%s164 + $0xe1] sm:$0xff]
      %v469 = vsel %vm210, %v460, 0
      %v472 = vsel %vm210, %v461, 0
      %v475 = vsel %vm210, %v462, 0
      %v478 = vsel %vm210, %v463, 0
      %v481 = vsel %vm210, %v464, 0
      %v484 = vsel %vm210, %v465, 0
      %v487 = vsel %vm210, %v466, 0
      %v490 = vsel %vm210, %v467, 0
      %v493 = vsel %vm227, %v171, 0
      %495 = vmatprep.subr.mxu0 0.0
      %496 = vmatpush1.msra.mxu0 0.0
      %497 = vmatprep.subr.mxu0 0.0
      %498 = vmatpush1.msra.mxu0 0.0
      %499 = vmatprep.subr.mxu0 0.0
      %500 = vmatpush1.msra.mxu0 0.0
      %501 = vmatprep.subr.mxu0 0.0
      %502 = vmatpush1.msra.mxu0 0.0
      %503 = vmatprep.subr.mxu0 0.0
      %504 = vmatpush1.msra.mxu0 0.0
      %505 = vmatprep.subr.mxu0 0.0
      %506 = vmatpush1.msra.mxu0 0.0
      %507 = vmatprep.subr.mxu0 0.0
      %508 = vmatpush1.msra.mxu0 0.0
      %509 = vmatprep.subr.mxu0 0.0
      %510 = vmatpush1.msra.mxu0 0.0
      %511 = vmatprep.subr.mxu0 0.0
      %512 = vmatpush1.msra.mxu0 0.0
      %513 = vmatprep.subr.mxu0 0.0
      %514 = vmatpush1.msra.mxu0 0.0
      %515 = vmatprep.subr.mxu0 0.0
      %516 = vmatpush1.msra.mxu0 0.0
      %517 = vmatprep.subr.mxu0 0.0
      %518 = vmatpush1.msra.mxu0 0.0
      %519 = vmatprep.subr.mxu0 0.0
      %520 = vmatpush1.msra.mxu0 0.0
      %521 = vmatprep.subr.mxu0 0.0
      %522 = vmatpush1.msra.mxu0 0.0
      %523 = vmatprep.subr.mxu0 0.0
      %524 = vmatpush1.msra.mxu0 0.0
      %525 = vmatprep.subr.mxu0 0.0
      %526 = vmatpush1.msra.mxu0 %v493
      %527 = vmatprep.subr.mxu0 0.0
      %528 = vmatpush2.msra.mxu0 0.0
      %529 = vmatprep.subr.mxu0 0.0
      %530 = vmatpush2.msra.mxu0 0.0
      %531 = vmatprep.subr.mxu0 0.0
      %532 = vmatpush2.msra.mxu0 0.0
      %533 = vmatprep.subr.mxu0 0.0
      %534 = vmatpush2.msra.mxu0 0.0
      %535 = vmatprep.subr.mxu0 0.0
      %536 = vmatpush2.msra.mxu0 0.0
      %537 = vmatprep.subr.mxu0 0.0
      %538 = vmatpush2.msra.mxu0 0.0
      %539 = vmatprep.subr.mxu0 0.0
      %540 = vmatpush2.msra.mxu0 0.0
      %541 = vmatprep.subr.mxu0 0.0
      %542 = vmatpush2.msra.mxu0 0.0
      %543 = vmatprep.subr.mxu0 0.0
      %544 = vmatpush2.msra.mxu0 0.0
      %545 = vmatprep.subr.mxu0 0.0
      %546 = vmatpush2.msra.mxu0 0.0
      %547 = vmatprep.subr.mxu0 0.0
      %548 = vmatpush2.msra.mxu0 0.0
      %549 = vmatprep.subr.mxu0 0.0
      %550 = vmatpush2.msra.mxu0 0.0
      %551 = vmatprep.subr.mxu0 0.0
      %552 = vmatpush2.msra.mxu0 0.0
      %553 = vmatprep.subr.mxu0 0.0
      %554 = vmatpush2.msra.mxu0 0.0
      %555 = vmatprep.subr.mxu0 0.0
      %556 = vmatpush2.msra.mxu0 0.0
      %557 = vmatprep.subr.mxu0 0.0
      %558 = vmatpush2.msra.mxu0 0.0
      %559 = vmatprep.mubr.f32.mxu0 0.0
      %560 = vmatmul.mubr.f32.gmra.mxu0 %v469
      %v561 = vpop.f32.mrf.mxu0
      %v562 = vadd.f32 0.0, %v561
      %v563 = vpop.f32.mrf.mxu0
      %564 = vmatprep.mubr.f32.mxu0 0.0
      %565 = vmatmul.mubr.f32.gmra.mxu0 %v472
      %v566 = vpop.f32.mrf.mxu0
      %v567 = vadd.f32 0.0, %v566
      %v568 = vpop.f32.mrf.mxu0
      %569 = vmatprep.mubr.f32.mxu0 0.0
      %570 = vmatmul.mubr.f32.gmra.mxu0 %v475
      %v571 = vpop.f32.mrf.mxu0
      %v572 = vadd.f32 0.0, %v571
      %v573 = vpop.f32.mrf.mxu0
      %574 = vmatprep.mubr.f32.mxu0 0.0
      %575 = vmatmul.mubr.f32.gmra.mxu0 %v478
      %v576 = vpop.f32.mrf.mxu0
      %v577 = vadd.f32 0.0, %v576
      %v578 = vpop.f32.mrf.mxu0
      %579 = vmatprep.mubr.f32.mxu0 0.0
      %580 = vmatmul.mubr.f32.gmra.mxu0 %v481
      %v581 = vpop.f32.mrf.mxu0
      %v582 = vadd.f32 0.0, %v581
      %v583 = vpop.f32.mrf.mxu0
      %584 = vmatprep.mubr.f32.mxu0 0.0
      %585 = vmatmul.mubr.f32.gmra.mxu0 %v484
      %v586 = vpop.f32.mrf.mxu0
      %v587 = vadd.f32 0.0, %v586
      %v588 = vpop.f32.mrf.mxu0
      %589 = vmatprep.mubr.f32.mxu0 0.0
      %590 = vmatmul.mubr.f32.gmra.mxu0 %v487
      %v591 = vpop.f32.mrf.mxu0
      %v592 = vadd.f32 0.0, %v591
      %v593 = vpop.f32.mrf.mxu0
      %594 = vmatprep.mubr.f32.mxu0 0.0
      %595 = vmatmul.mubr.f32.gmra.mxu0 %v490
      %v596 = vpop.f32.mrf.mxu0
      %v597 = vadd.f32 0.0, %v596
      %v598 = vpop.f32.mrf.mxu0
      %599 = vdwg.mxu0
      %v600 = vadd.f32 %v422, %v562
      %v601 = vadd.f32 %v427, %v567
      %v602 = vadd.f32 %v432, %v572
      %v603 = vadd.f32 %v437, %v577
      %v604 = vadd.f32 %v442, %v582
      %v605 = vadd.f32 %v447, %v587
      %v606 = vadd.f32 %v452, %v592
      %v607 = vadd.f32 %v457, %v597
      %s608 = scalar_lea.vmem %s164, 16
      %v609 = vld [vmem:[%s608] sm:$0xff]
      %v610 = vld [vmem:[%s608 + $0x20] sm:$0xff]
      %v611 = vld [vmem:[%s608 + $0x40] sm:$0xff]
      %v612 = vld [vmem:[%s608 + $0x60] sm:$0xff]
      %v613 = vld [vmem:[%s608 + $0x80] sm:$0xff]
      %v614 = vld [vmem:[%s608 + $0xa0] sm:$0xff]
      %v615 = vld [vmem:[%s608 + $0xc0] sm:$0xff]
      %v616 = vld [vmem:[%s608 + $0xe0] sm:$0xff]
      %v618 = vsel %vm210, %v609, 0
      %v621 = vsel %vm210, %v610, 0
      %v624 = vsel %vm210, %v611, 0
      %v627 = vsel %vm210, %v612, 0
      %v630 = vsel %vm210, %v613, 0
      %v633 = vsel %vm210, %v614, 0
      %v636 = vsel %vm210, %v615, 0
      %v639 = vsel %vm210, %v616, 0
      %v642 = vsel %vm227, %v172, 0
      %644 = vmatprep.subr.mxu0 0.0
      %645 = vmatpush1.msra.mxu0 0.0
      %646 = vmatprep.subr.mxu0 0.0
      %647 = vmatpush1.msra.mxu0 0.0
      %648 = vmatprep.subr.mxu0 0.0
      %649 = vmatpush1.msra.mxu0 0.0
      %650 = vmatprep.subr.mxu0 0.0
      %651 = vmatpush1.msra.mxu0 0.0
      %652 = vmatprep.subr.mxu0 0.0
      %653 = vmatpush1.msra.mxu0 0.0
      %654 = vmatprep.subr.mxu0 0.0
      %655 = vmatpush1.msra.mxu0 0.0
      %656 = vmatprep.subr.mxu0 0.0
      %657 = vmatpush1.msra.mxu0 0.0
      %658 = vmatprep.subr.mxu0 0.0
      %659 = vmatpush1.msra.mxu0 0.0
      %660 = vmatprep.subr.mxu0 0.0
      %661 = vmatpush1.msra.mxu0 0.0
      %662 = vmatprep.subr.mxu0 0.0
      %663 = vmatpush1.msra.mxu0 0.0
      %664 = vmatprep.subr.mxu0 0.0
      %665 = vmatpush1.msra.mxu0 0.0
      %666 = vmatprep.subr.mxu0 0.0
      %667 = vmatpush1.msra.mxu0 0.0
      %668 = vmatprep.subr.mxu0 0.0
      %669 = vmatpush1.msra.mxu0 0.0
      %670 = vmatprep.subr.mxu0 0.0
      %671 = vmatpush1.msra.mxu0 0.0
      %672 = vmatprep.subr.mxu0 0.0
      %673 = vmatpush1.msra.mxu0 0.0
      %674 = vmatprep.subr.mxu0 0.0
      %675 = vmatpush1.msra.mxu0 %v642
      %676 = vmatprep.subr.mxu0 0.0
      %677 = vmatpush2.msra.mxu0 0.0
      %678 = vmatprep.subr.mxu0 0.0
      %679 = vmatpush2.msra.mxu0 0.0
      %680 = vmatprep.subr.mxu0 0.0
      %681 = vmatpush2.msra.mxu0 0.0
      %682 = vmatprep.subr.mxu0 0.0
      %683 = vmatpush2.msra.mxu0 0.0
      %684 = vmatprep.subr.mxu0 0.0
      %685 = vmatpush2.msra.mxu0 0.0
      %686 = vmatprep.subr.mxu0 0.0
      %687 = vmatpush2.msra.mxu0 0.0
      %688 = vmatprep.subr.mxu0 0.0
      %689 = vmatpush2.msra.mxu0 0.0
      %690 = vmatprep.subr.mxu0 0.0
      %691 = vmatpush2.msra.mxu0 0.0
      %692 = vmatprep.subr.mxu0 0.0
      %693 = vmatpush2.msra.mxu0 0.0
      %694 = vmatprep.subr.mxu0 0.0
      %695 = vmatpush2.msra.mxu0 0.0
      %696 = vmatprep.subr.mxu0 0.0
      %697 = vmatpush2.msra.mxu0 0.0
      %698 = vmatprep.subr.mxu0 0.0
      %699 = vmatpush2.msra.mxu0 0.0
      %700 = vmatprep.subr.mxu0 0.0
      %701 = vmatpush2.msra.mxu0 0.0
      %702 = vmatprep.subr.mxu0 0.0
      %703 = vmatpush2.msra.mxu0 0.0
      %704 = vmatprep.subr.mxu0 0.0
      %705 = vmatpush2.msra.mxu0 0.0
      %706 = vmatprep.subr.mxu0 0.0
      %707 = vmatpush2.msra.mxu0 0.0
      %708 = vmatprep.mubr.f32.mxu0 0.0
      %709 = vmatmul.mubr.f32.gmra.mxu0 %v618
      %v710 = vpop.f32.mrf.mxu0
      %v711 = vadd.f32 0.0, %v710
      %v712 = vpop.f32.mrf.mxu0
      %713 = vmatprep.mubr.f32.mxu0 0.0
      %714 = vmatmul.mubr.f32.gmra.mxu0 %v621
      %v715 = vpop.f32.mrf.mxu0
      %v716 = vadd.f32 0.0, %v715
      %v717 = vpop.f32.mrf.mxu0
      %718 = vmatprep.mubr.f32.mxu0 0.0
      %719 = vmatmul.mubr.f32.gmra.mxu0 %v624
      %v720 = vpop.f32.mrf.mxu0
      %v721 = vadd.f32 0.0, %v720
      %v722 = vpop.f32.mrf.mxu0
      %723 = vmatprep.mubr.f32.mxu0 0.0
      %724 = vmatmul.mubr.f32.gmra.mxu0 %v627
      %v725 = vpop.f32.mrf.mxu0
      %v726 = vadd.f32 0.0, %v725
      %v727 = vpop.f32.mrf.mxu0
      %728 = vmatprep.mubr.f32.mxu0 0.0
      %729 = vmatmul.mubr.f32.gmra.mxu0 %v630
      %v730 = vpop.f32.mrf.mxu0
      %v731 = vadd.f32 0.0, %v730
      %v732 = vpop.f32.mrf.mxu0
      %733 = vmatprep.mubr.f32.mxu0 0.0
      %734 = vmatmul.mubr.f32.gmra.mxu0 %v633
      %v735 = vpop.f32.mrf.mxu0
      %v736 = vadd.f32 0.0, %v735
      %v737 = vpop.f32.mrf.mxu0
      %738 = vmatprep.mubr.f32.mxu0 0.0
      %739 = vmatmul.mubr.f32.gmra.mxu0 %v636
      %v740 = vpop.f32.mrf.mxu0
      %v741 = vadd.f32 0.0, %v740
      %v742 = vpop.f32.mrf.mxu0
      %743 = vmatprep.mubr.f32.mxu0 0.0
      %744 = vmatmul.mubr.f32.gmra.mxu0 %v639
      %v745 = vpop.f32.mrf.mxu0
      %v746 = vadd.f32 0.0, %v745
      %v747 = vpop.f32.mrf.mxu0
      %748 = vdwg.mxu0
      %v749 = vadd.f32 %v600, %v711
      %v750 = vadd.f32 %v601, %v716
      %v751 = vadd.f32 %v602, %v721
      %v752 = vadd.f32 %v603, %v726
      %v753 = vadd.f32 %v604, %v731
      %v754 = vadd.f32 %v605, %v736
      %v755 = vadd.f32 %v606, %v741
      %v756 = vadd.f32 %v607, %v746
      %757 = vrot.lane.b32.xlu0 %v609, 124
      %v758 = vpop.permute.xlu0 %757
      %759 = vrot.lane.b32.xlu0 %v610, 124
      %v760 = vpop.permute.xlu0 %759
      %761 = vrot.lane.b32.xlu0 %v611, 124
      %v762 = vpop.permute.xlu0 %761
      %763 = vrot.lane.b32.xlu0 %v612, 124
      %v764 = vpop.permute.xlu0 %763
      %765 = vrot.lane.b32.xlu0 %v613, 124
      %v766 = vpop.permute.xlu0 %765
      %767 = vrot.lane.b32.xlu0 %v614, 124
      %v768 = vpop.permute.xlu0 %767
      %769 = vrot.lane.b32.xlu0 %v615, 124
      %v770 = vpop.permute.xlu0 %769
      %771 = vrot.lane.b32.xlu0 %v616, 124
      %v772 = vpop.permute.xlu0 %771
      %v773 = vsel %vm210, %v758, 0
      %v775 = vsel %vm210, %v760, 0
      %v777 = vsel %vm210, %v762, 0
      %v779 = vsel %vm210, %v764, 0
      %v781 = vsel %vm210, %v766, 0
      %v783 = vsel %vm210, %v768, 0
      %v785 = vsel %vm210, %v770, 0
      %v787 = vsel %vm210, %v772, 0
      %v790 = vsel %vm227, %v173, 0
      %792 = vmatprep.subr.mxu0 0.0
      %793 = vmatpush1.msra.mxu0 0.0
      %794 = vmatprep.subr.mxu0 0.0
      %795 = vmatpush1.msra.mxu0 0.0
      %796 = vmatprep.subr.mxu0 0.0
      %797 = vmatpush1.msra.mxu0 0.0
      %798 = vmatprep.subr.mxu0 0.0
      %799 = vmatpush1.msra.mxu0 0.0
      %800 = vmatprep.subr.mxu0 0.0
      %801 = vmatpush1.msra.mxu0 0.0
      %802 = vmatprep.subr.mxu0 0.0
      %803 = vmatpush1.msra.mxu0 0.0
      %804 = vmatprep.subr.mxu0 0.0
      %805 = vmatpush1.msra.mxu0 0.0
      %806 = vmatprep.subr.mxu0 0.0
      %807 = vmatpush1.msra.mxu0 0.0
      %808 = vmatprep.subr.mxu0 0.0
      %809 = vmatpush1.msra.mxu0 0.0
      %810 = vmatprep.subr.mxu0 0.0
      %811 = vmatpush1.msra.mxu0 0.0
      %812 = vmatprep.subr.mxu0 0.0
      %813 = vmatpush1.msra.mxu0 0.0
      %814 = vmatprep.subr.mxu0 0.0
      %815 = vmatpush1.msra.mxu0 0.0
      %816 = vmatprep.subr.mxu0 0.0
      %817 = vmatpush1.msra.mxu0 0.0
      %818 = vmatprep.subr.mxu0 0.0
      %819 = vmatpush1.msra.mxu0 0.0
      %820 = vmatprep.subr.mxu0 0.0
      %821 = vmatpush1.msra.mxu0 0.0
      %822 = vmatprep.subr.mxu0 0.0
      %823 = vmatpush1.msra.mxu0 %v790
      %824 = vmatprep.subr.mxu0 0.0
      %825 = vmatpush2.msra.mxu0 0.0
      %826 = vmatprep.subr.mxu0 0.0
      %827 = vmatpush2.msra.mxu0 0.0
      %828 = vmatprep.subr.mxu0 0.0
      %829 = vmatpush2.msra.mxu0 0.0
      %830 = vmatprep.subr.mxu0 0.0
      %831 = vmatpush2.msra.mxu0 0.0
      %832 = vmatprep.subr.mxu0 0.0
      %833 = vmatpush2.msra.mxu0 0.0
      %834 = vmatprep.subr.mxu0 0.0
      %835 = vmatpush2.msra.mxu0 0.0
      %836 = vmatprep.subr.mxu0 0.0
      %837 = vmatpush2.msra.mxu0 0.0
      %838 = vmatprep.subr.mxu0 0.0
      %839 = vmatpush2.msra.mxu0 0.0
      %840 = vmatprep.subr.mxu0 0.0
      %841 = vmatpush2.msra.mxu0 0.0
      %842 = vmatprep.subr.mxu0 0.0
      %843 = vmatpush2.msra.mxu0 0.0
      %844 = vmatprep.subr.mxu0 0.0
      %845 = vmatpush2.msra.mxu0 0.0
      %846 = vmatprep.subr.mxu0 0.0
      %847 = vmatpush2.msra.mxu0 0.0
      %848 = vmatprep.subr.mxu0 0.0
      %849 = vmatpush2.msra.mxu0 0.0
      %850 = vmatprep.subr.mxu0 0.0
      %851 = vmatpush2.msra.mxu0 0.0
      %852 = vmatprep.subr.mxu0 0.0
      %853 = vmatpush2.msra.mxu0 0.0
      %854 = vmatprep.subr.mxu0 0.0
      %855 = vmatpush2.msra.mxu0 0.0
      %856 = vmatprep.mubr.f32.mxu0 0.0
      %857 = vmatmul.mubr.f32.gmra.mxu0 %v773
      %v858 = vpop.f32.mrf.mxu0
      %v859 = vadd.f32 0.0, %v858
      %v860 = vpop.f32.mrf.mxu0
      %861 = vmatprep.mubr.f32.mxu0 0.0
      %862 = vmatmul.mubr.f32.gmra.mxu0 %v775
      %v863 = vpop.f32.mrf.mxu0
      %v864 = vadd.f32 0.0, %v863
      %v865 = vpop.f32.mrf.mxu0
      %866 = vmatprep.mubr.f32.mxu0 0.0
      %867 = vmatmul.mubr.f32.gmra.mxu0 %v777
      %v868 = vpop.f32.mrf.mxu0
      %v869 = vadd.f32 0.0, %v868
      %v870 = vpop.f32.mrf.mxu0
      %871 = vmatprep.mubr.f32.mxu0 0.0
      %872 = vmatmul.mubr.f32.gmra.mxu0 %v779
      %v873 = vpop.f32.mrf.mxu0
      %v874 = vadd.f32 0.0, %v873
      %v875 = vpop.f32.mrf.mxu0
      %876 = vmatprep.mubr.f32.mxu0 0.0
      %877 = vmatmul.mubr.f32.gmra.mxu0 %v781
      %v878 = vpop.f32.mrf.mxu0
      %v879 = vadd.f32 0.0, %v878
      %v880 = vpop.f32.mrf.mxu0
      %881 = vmatprep.mubr.f32.mxu0 0.0
      %882 = vmatmul.mubr.f32.gmra.mxu0 %v783
      %v883 = vpop.f32.mrf.mxu0
      %v884 = vadd.f32 0.0, %v883
      %v885 = vpop.f32.mrf.mxu0
      %886 = vmatprep.mubr.f32.mxu0 0.0
      %887 = vmatmul.mubr.f32.gmra.mxu0 %v785
      %v888 = vpop.f32.mrf.mxu0
      %v889 = vadd.f32 0.0, %v888
      %v890 = vpop.f32.mrf.mxu0
      %891 = vmatprep.mubr.f32.mxu0 0.0
      %892 = vmatmul.mubr.f32.gmra.mxu0 %v787
      %v893 = vpop.f32.mrf.mxu0
      %v894 = vadd.f32 0.0, %v893
      %v895 = vpop.f32.mrf.mxu0
      %896 = vdwg.mxu0
      %v897 = vadd.f32 %v749, %v859
      %v898 = vadd.f32 %v750, %v864
      %v899 = vadd.f32 %v751, %v869
      %v900 = vadd.f32 %v752, %v874
      %v901 = vadd.f32 %v753, %v879
      %v902 = vadd.f32 %v754, %v884
      %v903 = vadd.f32 %v755, %v889
      %v904 = vadd.f32 %v756, %v894
      %v905 = vld [vmem:[%s608 + $0x1] sm:$0xff]
      %v906 = vld [vmem:[%s608 + $0x21] sm:$0xff]
      %v907 = vld [vmem:[%s608 + $0x41] sm:$0xff]
      %v908 = vld [vmem:[%s608 + $0x61] sm:$0xff]
      %v909 = vld [vmem:[%s608 + $0x81] sm:$0xff]
      %v910 = vld [vmem:[%s608 + $0xa1] sm:$0xff]
      %v911 = vld [vmem:[%s608 + $0xc1] sm:$0xff]
      %v912 = vld [vmem:[%s608 + $0xe1] sm:$0xff]
      %v914 = vsel %vm210, %v905, 0
      %v917 = vsel %vm210, %v906, 0
      %v920 = vsel %vm210, %v907, 0
      %v923 = vsel %vm210, %v908, 0
      %v926 = vsel %vm210, %v909, 0
      %v929 = vsel %vm210, %v910, 0
      %v932 = vsel %vm210, %v911, 0
      %v935 = vsel %vm210, %v912, 0
      %v938 = vsel %vm227, %v174, 0
      %940 = vmatprep.subr.mxu0 0.0
      %941 = vmatpush1.msra.mxu0 0.0
      %942 = vmatprep.subr.mxu0 0.0
      %943 = vmatpush1.msra.mxu0 0.0
      %944 = vmatprep.subr.mxu0 0.0
      %945 = vmatpush1.msra.mxu0 0.0
      %946 = vmatprep.subr.mxu0 0.0
      %947 = vmatpush1.msra.mxu0 0.0
      %948 = vmatprep.subr.mxu0 0.0
      %949 = vmatpush1.msra.mxu0 0.0
      %950 = vmatprep.subr.mxu0 0.0
      %951 = vmatpush1.msra.mxu0 0.0
      %952 = vmatprep.subr.mxu0 0.0
      %953 = vmatpush1.msra.mxu0 0.0
      %954 = vmatprep.subr.mxu0 0.0
      %955 = vmatpush1.msra.mxu0 0.0
      %956 = vmatprep.subr.mxu0 0.0
      %957 = vmatpush1.msra.mxu0 0.0
      %958 = vmatprep.subr.mxu0 0.0
      %959 = vmatpush1.msra.mxu0 0.0
      %960 = vmatprep.subr.mxu0 0.0
      %961 = vmatpush1.msra.mxu0 0.0
      %962 = vmatprep.subr.mxu0 0.0
      %963 = vmatpush1.msra.mxu0 0.0
      %964 = vmatprep.subr.mxu0 0.0
      %965 = vmatpush1.msra.mxu0 0.0
      %966 = vmatprep.subr.mxu0 0.0
      %967 = vmatpush1.msra.mxu0 0.0
      %968 = vmatprep.subr.mxu0 0.0
      %969 = vmatpush1.msra.mxu0 0.0
      %970 = vmatprep.subr.mxu0 0.0
      %971 = vmatpush1.msra.mxu0 %v938
      %972 = vmatprep.subr.mxu0 0.0
      %973 = vmatpush2.msra.mxu0 0.0
      %974 = vmatprep.subr.mxu0 0.0
      %975 = vmatpush2.msra.mxu0 0.0
      %976 = vmatprep.subr.mxu0 0.0
      %977 = vmatpush2.msra.mxu0 0.0
      %978 = vmatprep.subr.mxu0 0.0
      %979 = vmatpush2.msra.mxu0 0.0
      %980 = vmatprep.subr.mxu0 0.0
      %981 = vmatpush2.msra.mxu0 0.0
      %982 = vmatprep.subr.mxu0 0.0
      %983 = vmatpush2.msra.mxu0 0.0
      %984 = vmatprep.subr.mxu0 0.0
      %985 = vmatpush2.msra.mxu0 0.0
      %986 = vmatprep.subr.mxu0 0.0
      %987 = vmatpush2.msra.mxu0 0.0
      %988 = vmatprep.subr.mxu0 0.0
      %989 = vmatpush2.msra.mxu0 0.0
      %990 = vmatprep.subr.mxu0 0.0
      %991 = vmatpush2.msra.mxu0 0.0
      %992 = vmatprep.subr.mxu0 0.0
      %993 = vmatpush2.msra.mxu0 0.0
      %994 = vmatprep.subr.mxu0 0.0
      %995 = vmatpush2.msra.mxu0 0.0
      %996 = vmatprep.subr.mxu0 0.0
      %997 = vmatpush2.msra.mxu0 0.0
      %998 = vmatprep.subr.mxu0 0.0
      %999 = vmatpush2.msra.mxu0 0.0
      %1000 = vmatprep.subr.mxu0 0.0
      %1001 = vmatpush2.msra.mxu0 0.0
      %1002 = vmatprep.subr.mxu0 0.0
      %1003 = vmatpush2.msra.mxu0 0.0
      %1004 = vmatprep.mubr.f32.mxu0 0.0
      %1005 = vmatmul.mubr.f32.gmra.mxu0 %v914
      %v1006 = vpop.f32.mrf.mxu0
      %v1007 = vadd.f32 0.0, %v1006
      %v1008 = vpop.f32.mrf.mxu0
      %1009 = vmatprep.mubr.f32.mxu0 0.0
      %1010 = vmatmul.mubr.f32.gmra.mxu0 %v917
      %v1011 = vpop.f32.mrf.mxu0
      %v1012 = vadd.f32 0.0, %v1011
      %v1013 = vpop.f32.mrf.mxu0
      %1014 = vmatprep.mubr.f32.mxu0 0.0
      %1015 = vmatmul.mubr.f32.gmra.mxu0 %v920
      %v1016 = vpop.f32.mrf.mxu0
      %v1017 = vadd.f32 0.0, %v1016
      %v1018 = vpop.f32.mrf.mxu0
      %1019 = vmatprep.mubr.f32.mxu0 0.0
      %1020 = vmatmul.mubr.f32.gmra.mxu0 %v923
      %v1021 = vpop.f32.mrf.mxu0
      %v1022 = vadd.f32 0.0, %v1021
      %v1023 = vpop.f32.mrf.mxu0
      %1024 = vmatprep.mubr.f32.mxu0 0.0
      %1025 = vmatmul.mubr.f32.gmra.mxu0 %v926
      %v1026 = vpop.f32.mrf.mxu0
      %v1027 = vadd.f32 0.0, %v1026
      %v1028 = vpop.f32.mrf.mxu0
      %1029 = vmatprep.mubr.f32.mxu0 0.0
      %1030 = vmatmul.mubr.f32.gmra.mxu0 %v929
      %v1031 = vpop.f32.mrf.mxu0
      %v1032 = vadd.f32 0.0, %v1031
      %v1033 = vpop.f32.mrf.mxu0
      %1034 = vmatprep.mubr.f32.mxu0 0.0
      %1035 = vmatmul.mubr.f32.gmra.mxu0 %v932
      %v1036 = vpop.f32.mrf.mxu0
      %v1037 = vadd.f32 0.0, %v1036
      %v1038 = vpop.f32.mrf.mxu0
      %1039 = vmatprep.mubr.f32.mxu0 0.0
      %1040 = vmatmul.mubr.f32.gmra.mxu0 %v935
      %v1041 = vpop.f32.mrf.mxu0
      %v1042 = vadd.f32 0.0, %v1041
      %v1043 = vpop.f32.mrf.mxu0
      %1044 = vdwg.mxu0
      %v1045 = vadd.f32 %v897, %v1007
      %v1046 = vadd.f32 %v898, %v1012
      %v1047 = vadd.f32 %v899, %v1017
      %v1048 = vadd.f32 %v900, %v1022
      %v1049 = vadd.f32 %v901, %v1027
      %v1050 = vadd.f32 %v902, %v1032
      %v1051 = vadd.f32 %v903, %v1037
      %v1052 = vadd.f32 %v904, %v1042
      %s1053 = scalar_lea.vmem %s164, 32
      %v1054 = vld [vmem:[%s1053] sm:$0xff]
      %v1055 = vld [vmem:[%s1053 + $0x20] sm:$0xff]
      %v1056 = vld [vmem:[%s1053 + $0x40] sm:$0xff]
      %v1057 = vld [vmem:[%s1053 + $0x60] sm:$0xff]
      %v1058 = vld [vmem:[%s1053 + $0x80] sm:$0xff]
      %v1059 = vld [vmem:[%s1053 + $0xa0] sm:$0xff]
      %v1060 = vld [vmem:[%s1053 + $0xc0] sm:$0xff]
      %v1061 = vld [vmem:[%s1053 + $0xe0] sm:$0xff]
      %v1063 = vsel %vm210, %v1054, 0
      %v1066 = vsel %vm210, %v1055, 0
      %v1069 = vsel %vm210, %v1056, 0
      %v1072 = vsel %vm210, %v1057, 0
      %v1075 = vsel %vm210, %v1058, 0
      %v1078 = vsel %vm210, %v1059, 0
      %v1081 = vsel %vm210, %v1060, 0
      %v1084 = vsel %vm210, %v1061, 0
      %v1087 = vsel %vm227, %v175, 0
      %1089 = vmatprep.subr.mxu0 0.0
      %1090 = vmatpush1.msra.mxu0 0.0
      %1091 = vmatprep.subr.mxu0 0.0
      %1092 = vmatpush1.msra.mxu0 0.0
      %1093 = vmatprep.subr.mxu0 0.0
      %1094 = vmatpush1.msra.mxu0 0.0
      %1095 = vmatprep.subr.mxu0 0.0
      %1096 = vmatpush1.msra.mxu0 0.0
      %1097 = vmatprep.subr.mxu0 0.0
      %1098 = vmatpush1.msra.mxu0 0.0
      %1099 = vmatprep.subr.mxu0 0.0
      %1100 = vmatpush1.msra.mxu0 0.0
      %1101 = vmatprep.subr.mxu0 0.0
      %1102 = vmatpush1.msra.mxu0 0.0
      %1103 = vmatprep.subr.mxu0 0.0
      %1104 = vmatpush1.msra.mxu0 0.0
      %1105 = vmatprep.subr.mxu0 0.0
      %1106 = vmatpush1.msra.mxu0 0.0
      %1107 = vmatprep.subr.mxu0 0.0
      %1108 = vmatpush1.msra.mxu0 0.0
      %1109 = vmatprep.subr.mxu0 0.0
      %1110 = vmatpush1.msra.mxu0 0.0
      %1111 = vmatprep.subr.mxu0 0.0
      %1112 = vmatpush1.msra.mxu0 0.0
      %1113 = vmatprep.subr.mxu0 0.0
      %1114 = vmatpush1.msra.mxu0 0.0
      %1115 = vmatprep.subr.mxu0 0.0
      %1116 = vmatpush1.msra.mxu0 0.0
      %1117 = vmatprep.subr.mxu0 0.0
      %1118 = vmatpush1.msra.mxu0 0.0
      %1119 = vmatprep.subr.mxu0 0.0
      %1120 = vmatpush1.msra.mxu0 %v1087
      %1121 = vmatprep.subr.mxu0 0.0
      %1122 = vmatpush2.msra.mxu0 0.0
      %1123 = vmatprep.subr.mxu0 0.0
      %1124 = vmatpush2.msra.mxu0 0.0
      %1125 = vmatprep.subr.mxu0 0.0
      %1126 = vmatpush2.msra.mxu0 0.0
      %1127 = vmatprep.subr.mxu0 0.0
      %1128 = vmatpush2.msra.mxu0 0.0
      %1129 = vmatprep.subr.mxu0 0.0
      %1130 = vmatpush2.msra.mxu0 0.0
      %1131 = vmatprep.subr.mxu0 0.0
      %1132 = vmatpush2.msra.mxu0 0.0
      %1133 = vmatprep.subr.mxu0 0.0
      %1134 = vmatpush2.msra.mxu0 0.0
      %1135 = vmatprep.subr.mxu0 0.0
      %1136 = vmatpush2.msra.mxu0 0.0
      %1137 = vmatprep.subr.mxu0 0.0
      %1138 = vmatpush2.msra.mxu0 0.0
      %1139 = vmatprep.subr.mxu0 0.0
      %1140 = vmatpush2.msra.mxu0 0.0
      %1141 = vmatprep.subr.mxu0 0.0
      %1142 = vmatpush2.msra.mxu0 0.0
      %1143 = vmatprep.subr.mxu0 0.0
      %1144 = vmatpush2.msra.mxu0 0.0
      %1145 = vmatprep.subr.mxu0 0.0
      %1146 = vmatpush2.msra.mxu0 0.0
      %1147 = vmatprep.subr.mxu0 0.0
      %1148 = vmatpush2.msra.mxu0 0.0
      %1149 = vmatprep.subr.mxu0 0.0
      %1150 = vmatpush2.msra.mxu0 0.0
      %1151 = vmatprep.subr.mxu0 0.0
      %1152 = vmatpush2.msra.mxu0 0.0
      %1153 = vmatprep.mubr.f32.mxu0 0.0
      %1154 = vmatmul.mubr.f32.gmra.mxu0 %v1063
      %v1155 = vpop.f32.mrf.mxu0
      %v1156 = vadd.f32 0.0, %v1155
      %v1157 = vpop.f32.mrf.mxu0
      %1158 = vmatprep.mubr.f32.mxu0 0.0
      %1159 = vmatmul.mubr.f32.gmra.mxu0 %v1066
      %v1160 = vpop.f32.mrf.mxu0
      %v1161 = vadd.f32 0.0, %v1160
      %v1162 = vpop.f32.mrf.mxu0
      %1163 = vmatprep.mubr.f32.mxu0 0.0
      %1164 = vmatmul.mubr.f32.gmra.mxu0 %v1069
      %v1165 = vpop.f32.mrf.mxu0
      %v1166 = vadd.f32 0.0, %v1165
      %v1167 = vpop.f32.mrf.mxu0
      %1168 = vmatprep.mubr.f32.mxu0 0.0
      %1169 = vmatmul.mubr.f32.gmra.mxu0 %v1072
      %v1170 = vpop.f32.mrf.mxu0
      %v1171 = vadd.f32 0.0, %v1170
      %v1172 = vpop.f32.mrf.mxu0
      %1173 = vmatprep.mubr.f32.mxu0 0.0
      %1174 = vmatmul.mubr.f32.gmra.mxu0 %v1075
      %v1175 = vpop.f32.mrf.mxu0
      %v1176 = vadd.f32 0.0, %v1175
      %v1177 = vpop.f32.mrf.mxu0
      %1178 = vmatprep.mubr.f32.mxu0 0.0
      %1179 = vmatmul.mubr.f32.gmra.mxu0 %v1078
      %v1180 = vpop.f32.mrf.mxu0
      %v1181 = vadd.f32 0.0, %v1180
      %v1182 = vpop.f32.mrf.mxu0
      %1183 = vmatprep.mubr.f32.mxu0 0.0
      %1184 = vmatmul.mubr.f32.gmra.mxu0 %v1081
      %v1185 = vpop.f32.mrf.mxu0
      %v1186 = vadd.f32 0.0, %v1185
      %v1187 = vpop.f32.mrf.mxu0
      %1188 = vmatprep.mubr.f32.mxu0 0.0
      %1189 = vmatmul.mubr.f32.gmra.mxu0 %v1084
      %v1190 = vpop.f32.mrf.mxu0
      %v1191 = vadd.f32 0.0, %v1190
      %v1192 = vpop.f32.mrf.mxu0
      %1193 = vdwg.mxu0
      %v1194 = vadd.f32 %v1045, %v1156
      %v1195 = vadd.f32 %v1046, %v1161
      %v1196 = vadd.f32 %v1047, %v1166
      %v1197 = vadd.f32 %v1048, %v1171
      %v1198 = vadd.f32 %v1049, %v1176
      %v1199 = vadd.f32 %v1050, %v1181
      %v1200 = vadd.f32 %v1051, %v1186
      %v1201 = vadd.f32 %v1052, %v1191
      %1202 = vrot.lane.b32.xlu0 %v1054, 124
      %v1203 = vpop.permute.xlu0 %1202
      %1204 = vrot.lane.b32.xlu0 %v1055, 124
      %v1205 = vpop.permute.xlu0 %1204
      %1206 = vrot.lane.b32.xlu0 %v1056, 124
      %v1207 = vpop.permute.xlu0 %1206
      %1208 = vrot.lane.b32.xlu0 %v1057, 124
      %v1209 = vpop.permute.xlu0 %1208
      %1210 = vrot.lane.b32.xlu0 %v1058, 124
      %v1211 = vpop.permute.xlu0 %1210
      %1212 = vrot.lane.b32.xlu0 %v1059, 124
      %v1213 = vpop.permute.xlu0 %1212
      %1214 = vrot.lane.b32.xlu0 %v1060, 124
      %v1215 = vpop.permute.xlu0 %1214
      %1216 = vrot.lane.b32.xlu0 %v1061, 124
      %v1217 = vpop.permute.xlu0 %1216
      %v1218 = vsel %vm210, %v1203, 0
      %v1220 = vsel %vm210, %v1205, 0
      %v1222 = vsel %vm210, %v1207, 0
      %v1224 = vsel %vm210, %v1209, 0
      %v1226 = vsel %vm210, %v1211, 0
      %v1228 = vsel %vm210, %v1213, 0
      %v1230 = vsel %vm210, %v1215, 0
      %v1232 = vsel %vm210, %v1217, 0
      %v1235 = vsel %vm227, %v176, 0
      %1237 = vmatprep.subr.mxu0 0.0
      %1238 = vmatpush1.msra.mxu0 0.0
      %1239 = vmatprep.subr.mxu0 0.0
      %1240 = vmatpush1.msra.mxu0 0.0
      %1241 = vmatprep.subr.mxu0 0.0
      %1242 = vmatpush1.msra.mxu0 0.0
      %1243 = vmatprep.subr.mxu0 0.0
      %1244 = vmatpush1.msra.mxu0 0.0
      %1245 = vmatprep.subr.mxu0 0.0
      %1246 = vmatpush1.msra.mxu0 0.0
      %1247 = vmatprep.subr.mxu0 0.0
      %1248 = vmatpush1.msra.mxu0 0.0
      %1249 = vmatprep.subr.mxu0 0.0
      %1250 = vmatpush1.msra.mxu0 0.0
      %1251 = vmatprep.subr.mxu0 0.0
      %1252 = vmatpush1.msra.mxu0 0.0
      %1253 = vmatprep.subr.mxu0 0.0
      %1254 = vmatpush1.msra.mxu0 0.0
      %1255 = vmatprep.subr.mxu0 0.0
      %1256 = vmatpush1.msra.mxu0 0.0
      %1257 = vmatprep.subr.mxu0 0.0
      %1258 = vmatpush1.msra.mxu0 0.0
      %1259 = vmatprep.subr.mxu0 0.0
      %1260 = vmatpush1.msra.mxu0 0.0
      %1261 = vmatprep.subr.mxu0 0.0
      %1262 = vmatpush1.msra.mxu0 0.0
      %1263 = vmatprep.subr.mxu0 0.0
      %1264 = vmatpush1.msra.mxu0 0.0
      %1265 = vmatprep.subr.mxu0 0.0
      %1266 = vmatpush1.msra.mxu0 0.0
      %1267 = vmatprep.subr.mxu0 0.0
      %1268 = vmatpush1.msra.mxu0 %v1235
      %1269 = vmatprep.subr.mxu0 0.0
      %1270 = vmatpush2.msra.mxu0 0.0
      %1271 = vmatprep.subr.mxu0 0.0
      %1272 = vmatpush2.msra.mxu0 0.0
      %1273 = vmatprep.subr.mxu0 0.0
      %1274 = vmatpush2.msra.mxu0 0.0
      %1275 = vmatprep.subr.mxu0 0.0
      %1276 = vmatpush2.msra.mxu0 0.0
      %1277 = vmatprep.subr.mxu0 0.0
      %1278 = vmatpush2.msra.mxu0 0.0
      %1279 = vmatprep.subr.mxu0 0.0
      %1280 = vmatpush2.msra.mxu0 0.0
      %1281 = vmatprep.subr.mxu0 0.0
      %1282 = vmatpush2.msra.mxu0 0.0
      %1283 = vmatprep.subr.mxu0 0.0
      %1284 = vmatpush2.msra.mxu0 0.0
      %1285 = vmatprep.subr.mxu0 0.0
      %1286 = vmatpush2.msra.mxu0 0.0
      %1287 = vmatprep.subr.mxu0 0.0
      %1288 = vmatpush2.msra.mxu0 0.0
      %1289 = vmatprep.subr.mxu0 0.0
      %1290 = vmatpush2.msra.mxu0 0.0
      %1291 = vmatprep.subr.mxu0 0.0
      %1292 = vmatpush2.msra.mxu0 0.0
      %1293 = vmatprep.subr.mxu0 0.0
      %1294 = vmatpush2.msra.mxu0 0.0
      %1295 = vmatprep.subr.mxu0 0.0
      %1296 = vmatpush2.msra.mxu0 0.0
      %1297 = vmatprep.subr.mxu0 0.0
      %1298 = vmatpush2.msra.mxu0 0.0
      %1299 = vmatprep.subr.mxu0 0.0
      %1300 = vmatpush2.msra.mxu0 0.0
      %1301 = vmatprep.mubr.f32.mxu0 0.0
      %1302 = vmatmul.mubr.f32.gmra.mxu0 %v1218
      %v1303 = vpop.f32.mrf.mxu0
      %v1304 = vadd.f32 0.0, %v1303
      %v1305 = vpop.f32.mrf.mxu0
      %1306 = vmatprep.mubr.f32.mxu0 0.0
      %1307 = vmatmul.mubr.f32.gmra.mxu0 %v1220
      %v1308 = vpop.f32.mrf.mxu0
      %v1309 = vadd.f32 0.0, %v1308
      %v1310 = vpop.f32.mrf.mxu0
      %1311 = vmatprep.mubr.f32.mxu0 0.0
      %1312 = vmatmul.mubr.f32.gmra.mxu0 %v1222
      %v1313 = vpop.f32.mrf.mxu0
      %v1314 = vadd.f32 0.0, %v1313
      %v1315 = vpop.f32.mrf.mxu0
      %1316 = vmatprep.mubr.f32.mxu0 0.0
      %1317 = vmatmul.mubr.f32.gmra.mxu0 %v1224
      %v1318 = vpop.f32.mrf.mxu0
      %v1319 = vadd.f32 0.0, %v1318
      %v1320 = vpop.f32.mrf.mxu0
      %1321 = vmatprep.mubr.f32.mxu0 0.0
      %1322 = vmatmul.mubr.f32.gmra.mxu0 %v1226
      %v1323 = vpop.f32.mrf.mxu0
      %v1324 = vadd.f32 0.0, %v1323
      %v1325 = vpop.f32.mrf.mxu0
      %1326 = vmatprep.mubr.f32.mxu0 0.0
      %1327 = vmatmul.mubr.f32.gmra.mxu0 %v1228
      %v1328 = vpop.f32.mrf.mxu0
      %v1329 = vadd.f32 0.0, %v1328
      %v1330 = vpop.f32.mrf.mxu0
      %1331 = vmatprep.mubr.f32.mxu0 0.0
      %1332 = vmatmul.mubr.f32.gmra.mxu0 %v1230
      %v1333 = vpop.f32.mrf.mxu0
      %v1334 = vadd.f32 0.0, %v1333
      %v1335 = vpop.f32.mrf.mxu0
      %1336 = vmatprep.mubr.f32.mxu0 0.0
      %1337 = vmatmul.mubr.f32.gmra.mxu0 %v1232
      %v1338 = vpop.f32.mrf.mxu0
      %v1339 = vadd.f32 0.0, %v1338
      %v1340 = vpop.f32.mrf.mxu0
      %1341 = vdwg.mxu0
      %v1342 = vadd.f32 %v1194, %v1304
      %v1343 = vadd.f32 %v1195, %v1309
      %v1344 = vadd.f32 %v1196, %v1314
      %v1345 = vadd.f32 %v1197, %v1319
      %v1346 = vadd.f32 %v1198, %v1324
      %v1347 = vadd.f32 %v1199, %v1329
      %v1348 = vadd.f32 %v1200, %v1334
      %v1349 = vadd.f32 %v1201, %v1339
      %v1350 = vld [vmem:[%s1053 + $0x1] sm:$0xff]
      %v1351 = vld [vmem:[%s1053 + $0x21] sm:$0xff]
      %v1352 = vld [vmem:[%s1053 + $0x41] sm:$0xff]
      %v1353 = vld [vmem:[%s1053 + $0x61] sm:$0xff]
      %v1354 = vld [vmem:[%s1053 + $0x81] sm:$0xff]
      %v1355 = vld [vmem:[%s1053 + $0xa1] sm:$0xff]
      %v1356 = vld [vmem:[%s1053 + $0xc1] sm:$0xff]
      %v1357 = vld [vmem:[%s1053 + $0xe1] sm:$0xff]
      %v1359 = vsel %vm210, %v1350, 0
      %v1362 = vsel %vm210, %v1351, 0
      %v1365 = vsel %vm210, %v1352, 0
      %v1368 = vsel %vm210, %v1353, 0
      %v1371 = vsel %vm210, %v1354, 0
      %v1374 = vsel %vm210, %v1355, 0
      %v1377 = vsel %vm210, %v1356, 0
      %v1380 = vsel %vm210, %v1357, 0
      %v1383 = vsel %vm227, %v177, 0
      %1385 = vmatprep.subr.mxu0 0.0
      %1386 = vmatpush1.msra.mxu0 0.0
      %1387 = vmatprep.subr.mxu0 0.0
      %1388 = vmatpush1.msra.mxu0 0.0
      %1389 = vmatprep.subr.mxu0 0.0
      %1390 = vmatpush1.msra.mxu0 0.0
      %1391 = vmatprep.subr.mxu0 0.0
      %1392 = vmatpush1.msra.mxu0 0.0
      %1393 = vmatprep.subr.mxu0 0.0
      %1394 = vmatpush1.msra.mxu0 0.0
      %1395 = vmatprep.subr.mxu0 0.0
      %1396 = vmatpush1.msra.mxu0 0.0
      %1397 = vmatprep.subr.mxu0 0.0
      %1398 = vmatpush1.msra.mxu0 0.0
      %1399 = vmatprep.subr.mxu0 0.0
      %1400 = vmatpush1.msra.mxu0 0.0
      %1401 = vmatprep.subr.mxu0 0.0
      %1402 = vmatpush1.msra.mxu0 0.0
      %1403 = vmatprep.subr.mxu0 0.0
      %1404 = vmatpush1.msra.mxu0 0.0
      %1405 = vmatprep.subr.mxu0 0.0
      %1406 = vmatpush1.msra.mxu0 0.0
      %1407 = vmatprep.subr.mxu0 0.0
      %1408 = vmatpush1.msra.mxu0 0.0
      %1409 = vmatprep.subr.mxu0 0.0
      %1410 = vmatpush1.msra.mxu0 0.0
      %1411 = vmatprep.subr.mxu0 0.0
      %1412 = vmatpush1.msra.mxu0 0.0
      %1413 = vmatprep.subr.mxu0 0.0
      %1414 = vmatpush1.msra.mxu0 0.0
      %1415 = vmatprep.subr.mxu0 0.0
      %1416 = vmatpush1.msra.mxu0 %v1383
      %1417 = vmatprep.subr.mxu0 0.0
      %1418 = vmatpush2.msra.mxu0 0.0
      %1419 = vmatprep.subr.mxu0 0.0
      %1420 = vmatpush2.msra.mxu0 0.0
      %1421 = vmatprep.subr.mxu0 0.0
      %1422 = vmatpush2.msra.mxu0 0.0
      %1423 = vmatprep.subr.mxu0 0.0
      %1424 = vmatpush2.msra.mxu0 0.0
      %1425 = vmatprep.subr.mxu0 0.0
      %1426 = vmatpush2.msra.mxu0 0.0
      %1427 = vmatprep.subr.mxu0 0.0
      %1428 = vmatpush2.msra.mxu0 0.0
      %1429 = vmatprep.subr.mxu0 0.0
      %1430 = vmatpush2.msra.mxu0 0.0
      %1431 = vmatprep.subr.mxu0 0.0
      %1432 = vmatpush2.msra.mxu0 0.0
      %1433 = vmatprep.subr.mxu0 0.0
      %1434 = vmatpush2.msra.mxu0 0.0
      %1435 = vmatprep.subr.mxu0 0.0
      %1436 = vmatpush2.msra.mxu0 0.0
      %1437 = vmatprep.subr.mxu0 0.0
      %1438 = vmatpush2.msra.mxu0 0.0
      %1439 = vmatprep.subr.mxu0 0.0
      %1440 = vmatpush2.msra.mxu0 0.0
      %1441 = vmatprep.subr.mxu0 0.0
      %1442 = vmatpush2.msra.mxu0 0.0
      %1443 = vmatprep.subr.mxu0 0.0
      %1444 = vmatpush2.msra.mxu0 0.0
      %1445 = vmatprep.subr.mxu0 0.0
      %1446 = vmatpush2.msra.mxu0 0.0
      %1447 = vmatprep.subr.mxu0 0.0
      %1448 = vmatpush2.msra.mxu0 0.0
      %1449 = vmatprep.mubr.f32.mxu0 0.0
      %1450 = vmatmul.mubr.f32.gmra.mxu0 %v1359
      %v1451 = vpop.f32.mrf.mxu0
      %v1452 = vadd.f32 0.0, %v1451
      %v1453 = vpop.f32.mrf.mxu0
      %1454 = vmatprep.mubr.f32.mxu0 0.0
      %1455 = vmatmul.mubr.f32.gmra.mxu0 %v1362
      %v1456 = vpop.f32.mrf.mxu0
      %v1457 = vadd.f32 0.0, %v1456
      %v1458 = vpop.f32.mrf.mxu0
      %1459 = vmatprep.mubr.f32.mxu0 0.0
      %1460 = vmatmul.mubr.f32.gmra.mxu0 %v1365
      %v1461 = vpop.f32.mrf.mxu0
      %v1462 = vadd.f32 0.0, %v1461
      %v1463 = vpop.f32.mrf.mxu0
      %1464 = vmatprep.mubr.f32.mxu0 0.0
      %1465 = vmatmul.mubr.f32.gmra.mxu0 %v1368
      %v1466 = vpop.f32.mrf.mxu0
      %v1467 = vadd.f32 0.0, %v1466
      %v1468 = vpop.f32.mrf.mxu0
      %1469 = vmatprep.mubr.f32.mxu0 0.0
      %1470 = vmatmul.mubr.f32.gmra.mxu0 %v1371
      %v1471 = vpop.f32.mrf.mxu0
      %v1472 = vadd.f32 0.0, %v1471
      %v1473 = vpop.f32.mrf.mxu0
      %1474 = vmatprep.mubr.f32.mxu0 0.0
      %1475 = vmatmul.mubr.f32.gmra.mxu0 %v1374
      %v1476 = vpop.f32.mrf.mxu0
      %v1477 = vadd.f32 0.0, %v1476
      %v1478 = vpop.f32.mrf.mxu0
      %1479 = vmatprep.mubr.f32.mxu0 0.0
      %1480 = vmatmul.mubr.f32.gmra.mxu0 %v1377
      %v1481 = vpop.f32.mrf.mxu0
      %v1482 = vadd.f32 0.0, %v1481
      %v1483 = vpop.f32.mrf.mxu0
      %1484 = vmatprep.mubr.f32.mxu0 0.0
      %1485 = vmatmul.mubr.f32.gmra.mxu0 %v1380
      %v1486 = vpop.f32.mrf.mxu0
      %v1487 = vadd.f32 0.0, %v1486
      %v1488 = vpop.f32.mrf.mxu0
      %1489 = vdwg.mxu0
      %v1490 = vadd.f32 %v1342, %v1452
      %v1491 = vadd.f32 %v1343, %v1457
      %v1492 = vadd.f32 %v1344, %v1462
      %v1493 = vadd.f32 %v1345, %v1467
      %v1494 = vadd.f32 %v1346, %v1472
      %v1495 = vadd.f32 %v1347, %v1477
      %v1496 = vadd.f32 %v1348, %v1482
      %v1497 = vadd.f32 %v1349, %v1487
      %v1498 = vld [vmem:[%s2] sm:$0x1]
      %v1500 = vlaneseq
      %v1501 = vshrl.u32 %v1500, 7
      %v1502 = vsub.s32 0, %v1501
      %v1503 = vrot.slane %v1498, %v1502
      %v1505 = vadd.f32 %v1490, %v1503
      %v1506 = vadd.f32 %v1491, %v1503
      %v1507 = vadd.f32 %v1492, %v1503
      %v1508 = vadd.f32 %v1493, %v1503
      %v1509 = vadd.f32 %v1494, %v1503
      %v1510 = vadd.f32 %v1495, %v1503
      %v1511 = vadd.f32 %v1496, %v1503
      %v1512 = vadd.f32 %v1497, %v1503
      %1513 = vxpose.xlu0.b32.start [1/16] %v1505, 128
      %1514 = vxpose.xlu0.b32.cont [2/16] %v1506, 128
      %1515 = vxpose.xlu0.b32.cont [3/16] %v1507, 128
      %1516 = vxpose.xlu0.b32.cont [4/16] %v1508, 128
      %1517 = vxpose.xlu0.b32.cont [5/16] %v1509, 128
      %1518 = vxpose.xlu0.b32.cont [6/16] %v1510, 128
      %1519 = vxpose.xlu0.b32.cont [7/16] %v1511, 128
      %1520 = vxpose.xlu0.b32.cont [8/16] %v1512, 128
      %1521 = vxpose.xlu0.b32.cont [9/16] 0.0, 128
      %1522 = vxpose.xlu0.b32.cont [10/16] 0.0, 128
      %1523 = vxpose.xlu0.b32.cont [11/16] 0.0, 128
      %1524 = vxpose.xlu0.b32.cont [12/16] 0.0, 128
      %1525 = vxpose.xlu0.b32.cont [13/16] 0.0, 128
      %1526 = vxpose.xlu0.b32.cont [14/16] 0.0, 128
      %1527 = vxpose.xlu0.b32.cont [15/16] 0.0, 128
      %1528 = vxpose.xlu0.b32.end [16/16] 0.0, 128
      %v1529 = vpop.trf.xlu0
      %v1530 = vpop.trf.xlu0
      %v1531 = vpop.trf.xlu0
      %v1532 = vpop.trf.xlu0
      %v1533 = vpop.trf.xlu0
      %v1534 = vpop.trf.xlu0
      %v1535 = vpop.trf.xlu0
      %v1536 = vpop.trf.xlu0
      %v1537 = vpop.trf.xlu0
      %v1538 = vpop.trf.xlu0
      %v1539 = vpop.trf.xlu0
      %v1540 = vpop.trf.xlu0
      %v1541 = vpop.trf.xlu0
      %v1542 = vpop.trf.xlu0
      %v1543 = vpop.trf.xlu0
      %v1544 = vpop.trf.xlu0
      %vm1545 = vcmask 523264
      %1546 = vst.msk [vmem:[%s168] sm:$0xff] %vm1545, %v1529
      %p1547 = scmp.lt.s32.totalorder %s14, 1
      %s1548 = scalar_select %p1547, %s14, 1
      %s1549 = smul.addr %s1548, 8
      %s1550 = scalar_lea.vmem %s3, %s1549
      // Predicated region
      $region33: #{downsample_forward.1} parent=31 // pred_check
        %p1551 = pneg %p100
      $region34: #{downsample_forward.1} parent=31 // pred_check_branch
        %1553 = sbr.rel (%p1551) target = $region36
      $region35: #{downsample_forward.1} parent=31 // pred_region
        _
      $region36: #{downsample_forward.1} parent=31 // pred_fallthru
        _
    $region32: #{downsample_forward.1} parent=5 // pred_fallthru
      _
    %p1554 = scmp.le.s32.totalorder 2, %s9
    // Predicated region
    $region37: #{downsample_forward.1} parent=5 // pred_check
      %p1555 = pneg %p1554
    $region38: #{downsample_forward.1} parent=5 // pred_check_branch
      %1557 = sbr.rel (%p1555) target = $region40
    $region39: #{downsample_forward.1} parent=5 // pred_region
      %s1558 = ssub.s32 %s9, 2
      // Predicated region
      $region41: #{downsample_forward.1} parent=39 // pred_check
        %p1559 = pneg %p106
      $region42: #{downsample_forward.1} parent=39 // pred_check_branch
        %1561 = sbr.rel (%p1559) target = $region44
      $region43: #{downsample_forward.1} parent=39 // pred_region
        %p1562 = scmp.lt.s32.totalorder %s15, 1
        %s1563 = scalar_select %p1562, %s15, 1
        %s1564 = smul.addr %s1563, 8
        %s1565 = scalar_lea.vmem %s3, %s1564
      $region44: #{downsample_forward.1} parent=39 // pred_fallthru
        _
    $region40: #{downsample_forward.1} parent=5 // pred_fallthru
      _
  $region6: #{downsample_forward.1} parent=0 // loop_footer
    %s13 = sadd.s32 1, %s9
  $region7: #{downsample_forward.1} parent=0 // loop_footer_branch
    %8 = sbr.rel target = $region3
  $region8: #{downsample_forward.1} parent=0 // loop_exit
    _

</llo_original>
